<compile_context>
chip_gen: v6e
topology: v6e:2x2x1
jax: 0.10.0
libtpu: 0.0.40
codegen_flags: <defaults>
</compile_context>

<pallas_src>
import functools

import jax
import jax.numpy as jnp
from jax.experimental import pallas as pl
from jax.experimental.pallas import tpu as pltpu


def _round_up(x, m):
    return (x + m - 1) // m * m


def _pick_dim(d, candidates, small_align=None):
    """Pick (padded_dim, tile) for one GEMM dimension.

    Blocks need their last two dims divisible by the hardware tile (8/16, 128) or
    equal to the full array dim, so small dims are used whole (optionally rounded
    to the bf16 sublane pack of 16) and large dims are rounded to 128 and tiled.
    """
    if d < 128:
        p = _round_up(d, small_align) if small_align else d
        return p, p
    p = _round_up(d, 128)
    for t in candidates:
        if p % t == 0:
            return p, t
    return p, 128


# --------------------------------------------------------------------------
# Pallas kernels
# --------------------------------------------------------------------------
def _mm_kernel(*refs, relu, has_res):
    """out = A @ B + bias [+ residual] [ReLU], fp32 accumulation on the MXU."""
    if has_res:
        a_ref, b_ref, bias_ref, res_ref, o_ref, acc_ref = refs
    else:
        a_ref, b_ref, bias_ref, o_ref, acc_ref = refs
        res_ref = None

    @pl.when(pl.program_id(2) == 0)
    def _():
        acc_ref[...] = jnp.zeros_like(acc_ref)

    acc_ref[...] += jnp.dot(a_ref[...], b_ref[...],
                            preferred_element_type=jnp.float32)

    @pl.when(pl.program_id(2) == pl.num_programs(2) - 1)
    def _():
        r = acc_ref[...] + bias_ref[...]
        if has_res:
            r = r + res_ref[...].astype(jnp.float32)
        if relu:
            r = jnp.maximum(r, 0.0)
        o_ref[...] = r.astype(o_ref.dtype)


def matmul_bias(a, b, bias, *, relu=False, residual=None, out_dtype=jnp.bfloat16):
    """out = a @ b + bias (+ residual) (+ ReLU).  a/b fed to the MXU as bf16."""
    M, K = a.shape
    K2, N = b.shape
    assert K == K2

    Mp, tm = _pick_dim(M, (512, 256, 128), small_align=16)
    Kp, tk = _pick_dim(K, (512, 256, 128))
    Np, tn = _pick_dim(N, (256, 128))

    a_p = a.astype(jnp.bfloat16)
    if (Mp, Kp) != (M, K):
        a_p = jnp.pad(a_p, ((0, Mp - M), (0, Kp - K)))
    b_p = b.astype(jnp.bfloat16)
    if (Kp, Np) != (K, N):
        b_p = jnp.pad(b_p, ((0, Kp - K), (0, Np - N)))
    bias_p = bias.astype(jnp.float32).reshape(1, N)
    if Np != N:
        bias_p = jnp.pad(bias_p, ((0, 0), (0, Np - N)))

    inputs = [a_p, b_p, bias_p]
    in_specs = [
        pl.BlockSpec((tm, tk), lambda i, j, k: (i, k)),
        pl.BlockSpec((tk, tn), lambda i, j, k: (k, j)),
        pl.BlockSpec((1, tn), lambda i, j, k: (0, j)),
    ]
    has_res = residual is not None
    if has_res:
        r_p = residual
        if (Mp, Np) != r_p.shape:
            r_p = jnp.pad(r_p, ((0, Mp - M), (0, Np - N)))
        inputs.append(r_p)
        in_specs.append(pl.BlockSpec((tm, tn), lambda i, j, k: (i, j)))

    out = pl.pallas_call(
        functools.partial(_mm_kernel, relu=relu, has_res=has_res),
        out_shape=jax.ShapeDtypeStruct((Mp, Np), out_dtype),
        grid_spec=pltpu.PrefetchScalarGridSpec(
            num_scalar_prefetch=0,
            grid=(Mp // tm, Np // tn, Kp // tk),
            in_specs=in_specs,
            out_specs=pl.BlockSpec((tm, tn), lambda i, j, k: (i, j)),
            scratch_shapes=[pltpu.VMEM((tm, tn), jnp.float32)],
        ),
        compiler_params=pltpu.CompilerParams(
            dimension_semantics=("parallel", "parallel", "arbitrary"),
            vmem_limit_bytes=32 * 1024 * 1024),
    )(*inputs)
    if (Mp, Np) != (M, N):
        out = out[:M, :N]
    return out


def _max9_kernel(x_ref, o_ref):
    m = x_ref[0]
    for t in range(1, 9):
        m = jnp.maximum(m, x_ref[t])
    o_ref[...] = m


def maxpool2d_3x3_s2_p1(x):
    """PyTorch nn.MaxPool2d(kernel_size=3, stride=2, padding=1) on NHWC input."""
    N, H, W, C = x.shape
    Ho = (H + 2 - 3) // 2 + 1
    Wo = (W + 2 - 3) // 2 + 1
    neg = float(jnp.finfo(jnp.bfloat16).min)
    xp = jnp.pad(x, ((0, 0), (1, 1), (1, 1), (0, 0)), constant_values=neg)
    pats = [xp[:, ky:ky + 2 * Ho:2, kx:kx + 2 * Wo:2, :]
            for ky in range(3) for kx in range(3)]
    stacked = jnp.stack(pats, axis=0).reshape(9, N * Ho * Wo, C)

    rows = N * Ho * Wo
    rt = 512 if rows >= 512 else _round_up(rows, 16)
    rows_p = _round_up(rows, rt)
    if rows_p != rows:
        stacked = jnp.pad(stacked, ((0, 0), (0, rows_p - rows), (0, 0)),
                          constant_values=neg)

    out = pl.pallas_call(
        _max9_kernel,
        out_shape=jax.ShapeDtypeStruct((rows_p, C), x.dtype),
        grid=(rows_p // rt,),
        in_specs=[pl.BlockSpec((9, rt, C), lambda i: (0, i, 0))],
        out_specs=pl.BlockSpec((rt, C), lambda i: (i, 0)),
        compiler_params=pltpu.CompilerParams(
            dimension_semantics=("parallel",)),
    )(stacked)
    if rows_p != rows:
        out = out[:rows]
    return out.reshape(N, Ho, Wo, C)


def _avgpool_kernel(x_ref, o_ref, *, inv_hw):
    o_ref[...] = jnp.sum(x_ref[...].astype(jnp.float32), axis=1) * inv_hw


def global_avg_pool(x):
    """AdaptiveAvgPool2d((1,1)) on NHWC input -> (N, C) float32 (VPU reduction)."""
    N, H, W, C = x.shape
    xr = x.reshape(N, H * W, C)
    return pl.pallas_call(
        functools.partial(_avgpool_kernel, inv_hw=1.0 / (H * W)),
        out_shape=jax.ShapeDtypeStruct((N, C), jnp.float32),
        grid=(1,),
        in_specs=[pl.BlockSpec((N, H * W, C), lambda i: (0, 0, 0))],
        out_specs=pl.BlockSpec((N, C), lambda i: (0, 0)),
    )(xr)


# --------------------------------------------------------------------------
# Conv glue: NHWC activations, im2col (plain-JAX slicing) + Pallas GEMM.
# For 1x1 convs the GEMM "A" matrix is a pure reshape (zero-copy).
# --------------------------------------------------------------------------
def conv_block(x, p, *, stride, padding, relu, residual=None):
    N, H, W, C = x.shape
    k = p["k"]
    co = p["B"].shape[1]
    Ho = (H + 2 * padding - k) // stride + 1
    Wo = (W + 2 * padding - k) // stride + 1

    if k == 1 and padding == 0:
        xs = x if stride == 1 else x[:, ::stride, ::stride, :]
        A = xs.reshape(N * Ho * Wo, C)
    else:
        xp = jnp.pad(x, ((0, 0), (padding, padding), (padding, padding), (0, 0)))
        # K ordering = (ky*kw + kx)*C + c, matching the weight layout built at init.
        cols = [xp[:, ky:ky + stride * Ho:stride, kx:kx + stride * Wo:stride, :]
                for ky in range(k) for kx in range(k)]
        A = jnp.concatenate(cols, axis=-1).reshape(N * Ho * Wo, k * k * C)

    res = None if residual is None else residual.reshape(N * Ho * Wo, co)
    out = matmul_bias(A, p["B"], p["b"], relu=relu, residual=res,
                      out_dtype=jnp.bfloat16)
    return out.reshape(N, Ho, Wo, co)


# --------------------------------------------------------------------------
# Parameter construction (deterministic, synthetic).  BatchNorm (eval mode) is
# folded into the conv weights/bias at init; weights are stored pre-transposed
# in GEMM layout (K, Co) as bf16.
# --------------------------------------------------------------------------
def _he_conv(key, co, ci, k):
    std = (2.0 / (co * k * k)) ** 0.5
    return jax.random.normal(key, (co, ci, k, k), jnp.float32) * std


def init_conv_bn(key, ci, co, k, eps=1e-5):
    w = _he_conv(key, co, ci, k)
    gamma = jnp.ones((co,), jnp.float32)
    beta = jnp.zeros((co,), jnp.float32)
    mean = jnp.zeros((co,), jnp.float32)
    var = jnp.ones((co,), jnp.float32)
    scale = gamma / jnp.sqrt(var + eps)
    w_f = w * scale[:, None, None, None]
    b_f = beta - mean * scale
    # (Co, Ci, kh, kw) -> (kh, kw, Ci, Co) -> (kh*kw*Ci, Co); bf16 once at init.
    B = w_f.transpose(2, 3, 1, 0).reshape(k * k * ci, co).astype(jnp.bfloat16)
    return dict(B=B, b=b_f, k=k)


def init_bottleneck(key, c_in, planes, stride):
    ks = jax.random.split(key, 4)
    p = dict(conv1=init_conv_bn(ks[0], c_in, planes, 1),
             conv2=init_conv_bn(ks[1], planes, planes, 3),
             conv3=init_conv_bn(ks[2], planes, planes * 4, 1),
             stride=stride)
    if stride != 1 or c_in != planes * 4:
        p["down"] = init_conv_bn(ks[3], c_in, planes * 4, 1)
    return p


_LAYERS = [(64, 3, 1), (128, 4, 2), (256, 6, 2), (512, 3, 2)]


def init_encoder(key, embed_size):
    ks = jax.random.split(key, 8)
    params = dict(conv1=init_conv_bn(ks[0], 3, 64, 7), layers=[])
    c_in = 64
    for li, (planes, blocks, stride) in enumerate(_LAYERS):
        bkeys = jax.random.split(ks[1 + li], blocks)
        layer = []
        for bi in range(blocks):
            s = stride if bi == 0 else 1
            layer.append(init_bottleneck(bkeys[bi], c_in, planes, s))
            c_in = planes * 4
        params["layers"].append(layer)
    fan_in = 2048
    bound = 1.0 / (fan_in ** 0.5)
    wkey, bkey = jax.random.split(ks[5])
    # Pre-transposed (fan_in, embed_size) so the forward pass never transposes it.
    params["embed_w"] = jax.random.uniform(wkey, (fan_in, embed_size),
                                           jnp.float32, -bound, bound)
    params["embed_b"] = jax.random.uniform(bkey, (embed_size,),
                                           jnp.float32, -bound, bound)
    return params


# --------------------------------------------------------------------------
# Forward pass (EncoderCNN.forward)
# --------------------------------------------------------------------------
def bottleneck(x, p):
    if "down" in p:
        identity = conv_block(x, p["down"], stride=p["stride"], padding=0, relu=False)
    else:
        identity = x
    out = conv_block(x, p["conv1"], stride=1, padding=0, relu=True)
    out = conv_block(out, p["conv2"], stride=p["stride"], padding=1, relu=True)
    # Residual add + ReLU fused into the conv3 GEMM epilogue.
    out = conv_block(out, p["conv3"], stride=1, padding=0, relu=True,
                     residual=identity)
    return out


def encoder_forward(params, images):
    # External boundary: NCHW float32 -> NHWC bfloat16 (single transpose + cast).
    x = images.transpose(0, 2, 3, 1).astype(jnp.bfloat16)
    x = conv_block(x, params["conv1"], stride=2, padding=3, relu=True)
    x = maxpool2d_3x3_s2_p1(x)
    for layer in params["layers"]:
        for block in layer:
            x = bottleneck(x, block)
    feats = global_avg_pool(x)                       # features.view(N, -1); spatial is 1x1
    return matmul_bias(feats, params["embed_w"], params["embed_b"],
                       relu=False, out_dtype=jnp.float32)


# --------------------------------------------------------------------------
if __name__ == "__main__":
    key = jax.random.PRNGKey(0)
    pkey, xkey = jax.random.split(key)

    embed_size = 32
    params = init_encoder(pkey, embed_size)

    # images: NCHW, matching the PyTorch module's expected input layout.
    images = jax.random.normal(xkey, (2, 3, 64, 64), jnp.float32)

    out = encoder_forward(params, images)
    out = jax.block_until_ready(out)

    assert out.shape == (2, embed_size), out.shape
    assert bool(jnp.all(jnp.isfinite(out)))
    print("KERNEL_OK")
</pallas_src>

<mosaic_0001>
module attributes {stable_mosaic.version = 11 : i64} {
  func.func @_mm_kernel(%arg0: i32, %arg1: i32, %arg2: i32, %arg3: memref<512x256xbf16, #tpu.memory_space<vmem>>, %arg4: memref<256x64xbf16, #tpu.memory_space<vmem>>, %arg5: memref<1x64xf32, #tpu.memory_space<vmem>>, %arg6: memref<512x64xbf16, #tpu.memory_space<vmem>>, %arg7: memref<512x64xf32, #tpu.memory_space<vmem>>) attributes {dimension_semantics = [#tpu.dimension_semantics<parallel>, #tpu.dimension_semantics<parallel>, #tpu.dimension_semantics<arbitrary>], iteration_bounds = array<i64: 4, 1, 1>, scalar_prefetch = 0 : i64, scratch_operands = 1 : i64, tpu.core_type = #tpu.core_type<tc>, window_params = [{transform_indices = @transform_0, window_bounds = array<i64: 512, 256>}, {transform_indices = @transform_1, window_bounds = array<i64: 256, 64>}, {transform_indices = @transform_2, window_bounds = array<i64: 1, 64>}, {transform_indices = @transform_3, window_bounds = array<i64: 512, 64>}]} {
    %c0_i32 = arith.constant 0 : i32
    %0 = arith.cmpi eq, %arg2, %c0_i32 : i32
    %1 = arith.extui %0 : i1 to i32
    %c0_i32_0 = arith.constant 0 : i32
    %2 = arith.cmpi ne, %1, %c0_i32_0 : i32
    scf.if %2 {
      %cst_10 = arith.constant 0.000000e+00 : f32
      %12 = vector.broadcast %cst_10 : f32 to vector<512x64xf32>
      %c0_11 = arith.constant 0 : index
      %c0_12 = arith.constant 0 : index
      %13 = vector.load %arg7[%c0_11, %c0_12] : memref<512x64xf32, #tpu.memory_space<vmem>>, vector<512x64xf32>
      tpu.vector_store %arg7[%c0_11, %c0_12], %12 {strides = array<i32>} : memref<512x64xf32, #tpu.memory_space<vmem>>, vector<512x64xf32>,
    } else {
    }
    %c0 = arith.constant 0 : index
    %c0_1 = arith.constant 0 : index
    %3 = vector.load %arg7[%c0, %c0_1] : memref<512x64xf32, #tpu.memory_space<vmem>>, vector<512x64xf32>
    %c0_2 = arith.constant 0 : index
    %c0_3 = arith.constant 0 : index
    %4 = vector.load %arg3[%c0_2, %c0_3] : memref<512x256xbf16, #tpu.memory_space<vmem>>, vector<512x256xbf16>
    %c0_4 = arith.constant 0 : index
    %c0_5 = arith.constant 0 : index
    %5 = vector.load %arg4[%c0_4, %c0_5] : memref<256x64xbf16, #tpu.memory_space<vmem>>, vector<256x64xbf16>
    %cst = arith.constant dense<0.000000e+00> : vector<512x64xf32>
    %6 = tpu.matmul %4, %5, %cst {dimension_numbers = #tpu.dot_dimension_numbers<[1], [0], [0], [1], [0, 0, 1, 1], [], []>} : vector<512x256xbf16>, vector<256x64xbf16>, vector<512x64xf32> -> vector<512x64xf32>
    %7 = arith.addf %3, %6 : vector<512x64xf32>
    %c0_6 = arith.constant 0 : index
    %c0_7 = arith.constant 0 : index
    %8 = vector.load %arg7[%c0_6, %c0_7] : memref<512x64xf32, #tpu.memory_space<vmem>>, vector<512x64xf32>
    tpu.vector_store %arg7[%c0_6, %c0_7], %7 {strides = array<i32>} : memref<512x64xf32, #tpu.memory_space<vmem>>, vector<512x64xf32>,
    %c0_i32_8 = arith.constant 0 : i32
    %9 = arith.cmpi eq, %arg2, %c0_i32_8 : i32
    %10 = arith.extui %9 : i1 to i32
    %c0_i32_9 = arith.constant 0 : i32
    %11 = arith.cmpi ne, %10, %c0_i32_9 : i32
    scf.if %11 {
      %c0_10 = arith.constant 0 : index
      %c0_11 = arith.constant 0 : index
      %12 = vector.load %arg7[%c0_10, %c0_11] : memref<512x64xf32, #tpu.memory_space<vmem>>, vector<512x64xf32>
      %c0_12 = arith.constant 0 : index
      %c0_13 = arith.constant 0 : index
      %13 = vector.load %arg5[%c0_12, %c0_13] : memref<1x64xf32, #tpu.memory_space<vmem>>, vector<1x64xf32>
      %14 = vector.broadcast %13 : vector<1x64xf32> to vector<512x64xf32>
      %15 = arith.addf %12, %14 : vector<512x64xf32>
      %cst_14 = arith.constant 0.000000e+00 : f32
      %16 = vector.broadcast %cst_14 : f32 to vector<512x64xf32>
      %17 = arith.maximumf %15, %16 : vector<512x64xf32>
      %18 = arith.truncf %17 : vector<512x64xf32> to vector<512x64xbf16>
      %c0_15 = arith.constant 0 : index
      %c0_16 = arith.constant 0 : index
      %19 = vector.load %arg6[%c0_15, %c0_16] : memref<512x64xbf16, #tpu.memory_space<vmem>>, vector<512x64xbf16>
      tpu.vector_store %arg6[%c0_15, %c0_16], %18 {strides = array<i32>} : memref<512x64xbf16, #tpu.memory_space<vmem>>, vector<512x64xbf16>,
    } else {
    }
    return
  }
  func.func @transform_0(%arg0: i32, %arg1: i32, %arg2: i32) -> (i32, i32) {
    %c0_i32 = arith.constant 0 : i32
    return %arg0, %arg2 : i32, i32
  }
  func.func @transform_1(%arg0: i32, %arg1: i32, %arg2: i32) -> (i32, i32) {
    %c0_i32 = arith.constant 0 : i32
    return %arg2, %arg1 : i32, i32
  }
  func.func @transform_2(%arg0: i32, %arg1: i32, %arg2: i32) -> (i32, i32) {
    %c0_i32 = arith.constant 0 : i32
    %c0_i32_0 = arith.constant 0 : i32
    return %c0_i32, %arg1 : i32, i32
  }
  func.func @transform_3(%arg0: i32, %arg1: i32, %arg2: i32) -> (i32, i32) {
    %c0_i32 = arith.constant 0 : i32
    return %arg0, %arg1 : i32, i32
  }
}

</mosaic_0001>

<llo_original>
// kernel: tpu_custom_call.1
$region0: #{tpu_custom_call.1}
  #allocation0 [shape = 'u32[]', space=smem, size = 0x4, offset = 0x4, fixed_abs, tag = 'smem constant byte address 0x4 - core index']
  #allocation1 [shape = 'u32[144,128]{1,0:T(1,128)}', space=vmem, size = 0x12000, scoped, tag = 'internal scratch']
  #allocation2 [shape = 'f32[512,64]{1,0:T(8,128)}', space=vmem, size = 0x40000, scoped, tag = 'scratch operand']
  %s0 = inlined_call_operand.hbm [shape: bf16[2048,256], index: 0, kind: input, shape index: {}]
  %s1 = inlined_call_operand.vmem [shape: bf16[256,64], index: 1, kind: input, shape index: {}]
  %s2 = inlined_call_operand.vmem [shape: f32[1,64], index: 2, kind: input, shape index: {}]
  %s3 = inlined_call_operand.vmem [shape: bf16[2048,64], index: 3, kind: output, shape index: {}]
  %s4 = sld [smem:[#allocation0]]
  $region57: #{tpu_custom_call.1} parent=0
    _
  %s6 = ssub.s32 1, %s4
  %s7 = scalar_select 0, %s6, %s4
  $region1: #{tpu_custom_call.1} parent=0
    #allocation3 [shape = 'u8[524288]{0}', space=vmem, size = 0x80000, scoped, tag = 'input window, operand 0']
    #allocation4 [shape = 's32[2]{0}', space=sflag, size = 0x8, scoped, tag = 'scoped memory for tpu_custom_call.1']
    %8 = vsyncpa [#allocation4], 0
    %s9 = scalar_lea.sflag [#allocation4], 1
    %10 = vsyncpa %s9, 0
    loop: start=0, step=1, limit=6
    $region2: #{tpu_custom_call.1} parent=1 // loop_pre_header
      _
    $region3: #{tpu_custom_call.1} parent=1 // loop_header
      %s12 = sphi 0, %s16
      %p13 = scmp.ge.s32.totalorder %s12, 6
      %s19 = sphi 0, %s38
      %s20 = sphi 0, %s34
      %s21 = sphi 0, %s30
      %s22 = sphi 0, %s19
      %s23 = sphi 0, %s20
      %s24 = sphi 0, %s21
      %s25 = sphi 0, %s22
      %s26 = sphi 0, %s23
      %s27 = sphi 0, %s24
      %s43 = sphi 0, %s45
      %s46 = sphi 0, %s43
      %s47 = sphi 0, %s46
      %s63 = sphi 0, %s47
      %s71 = sphi 0, %s73
      %s74 = sphi 0, %s71
      %s75 = sphi 0, %s74
      %s91 = sphi 0, %s75
      %s97 = sphi 0, %s99
      %s100 = sphi 0, %s97
      %s101 = sphi 0, %s100
      %s117 = sphi 0, %s101
      %s125 = sphi 0, %s127
      %s128 = sphi 0, %s125
      %s129 = sphi 0, %s128
      %s145 = sphi 0, %s129
    $region4: #{tpu_custom_call.1} parent=1 // loop_header_branch
      %15 = sbr.rel (%p13) target = $region8
    $region5: #{tpu_custom_call.1} parent=1 // loop_body
      %s17 = ssub.s32 %s12, 1
      %s18 = ssub.s32 %s12, 2
      %s28 = sadd.s32 1, %s21
      %p29 = scmp.ge.s32.totalorder %s28, 1
      %s30 = scalar_select %p29, 0, %s28
      %s31 = sadd.s32 1, %s20
      %s32 = scalar_select %p29, %s31, %s20
      %p33 = scmp.ge.s32.totalorder %s32, 1
      %s34 = scalar_select %p33, 0, %s32
      %s35 = sadd.s32 1, %s19
      %s36 = scalar_select %p33, %s35, %s19
      %p37 = scmp.ge.s32.totalorder %s36, 4
      %s38 = scalar_select %p37, 0, %s36
      %s39 = ssub.s32 %s19, %s38
      %s40 = ssub.s32 %s21, %s30
      %s41 = sor.u32 %s39, %s40
      %p42 = scmp.eq.s32.totalorder %s41, 0
      %s44 = sadd.s32 %s43, 1
      %s45 = scalar_select %p42, %s43, %s44
      %p48 = pneg %p42
      %p49 = scmp.eq.s32.totalorder %s12, 3
      %p50 = por %p48, %p49
      %p51 = scmp.ne.s32.totalorder %s43, %s46
      %p52 = scmp.eq.s32.totalorder %s12, 0
      %p53 = por %p51, %p52
      %p54 = scmp.ne.s32.totalorder %s43, %s46
      %p55 = scmp.eq.s32.totalorder %s17, 3
      %p56 = por %p54, %p55
      %p57 = scmp.ne.s32.totalorder %s46, %s47
      %p58 = scmp.eq.s32.totalorder %s17, 0
      %p59 = por %p57, %p58
      %p60 = scmp.ne.s32.totalorder %s46, %s47
      %p61 = scmp.eq.s32.totalorder %s18, 3
      %p62 = por %p60, %p61
      %p64 = scmp.ne.s32.totalorder %s47, %s63
      %p65 = scmp.eq.s32.totalorder %s18, 0
      %p66 = por %p64, %p65
      %s67 = ssub.s32 %s21, %s30
      %s68 = ssub.s32 %s20, %s34
      %s69 = sor.u32 %s67, %s68
      %p70 = scmp.eq.s32.totalorder %s69, 0
      %s72 = sadd.s32 %s71, 1
      %s73 = scalar_select %p70, %s71, %s72
      %p76 = pneg %p70
      %p77 = scmp.eq.s32.totalorder %s12, 3
      %p78 = por %p76, %p77
      %p79 = scmp.ne.s32.totalorder %s71, %s74
      %p80 = scmp.eq.s32.totalorder %s12, 0
      %p81 = por %p79, %p80
      %p82 = scmp.ne.s32.totalorder %s71, %s74
      %p83 = scmp.eq.s32.totalorder %s17, 3
      %p84 = por %p82, %p83
      %p85 = scmp.ne.s32.totalorder %s74, %s75
      %p86 = scmp.eq.s32.totalorder %s17, 0
      %p87 = por %p85, %p86
      %p88 = scmp.ne.s32.totalorder %s74, %s75
      %p89 = scmp.eq.s32.totalorder %s18, 3
      %p90 = por %p88, %p89
      %p92 = scmp.ne.s32.totalorder %s75, %s91
      %p93 = scmp.eq.s32.totalorder %s18, 0
      %p94 = por %p92, %p93
      %s95 = ssub.s32 %s20, %s34
      %p96 = scmp.eq.s32.totalorder %s95, 0
      %s98 = sadd.s32 %s97, 1
      %s99 = scalar_select %p96, %s97, %s98
      %p102 = pneg %p96
      %p103 = scmp.eq.s32.totalorder %s12, 3
      %p104 = por %p102, %p103
      %p105 = scmp.ne.s32.totalorder %s97, %s100
      %p106 = scmp.eq.s32.totalorder %s12, 0
      %p107 = por %p105, %p106
      %p108 = scmp.ne.s32.totalorder %s97, %s100
      %p109 = scmp.eq.s32.totalorder %s17, 3
      %p110 = por %p108, %p109
      %p111 = scmp.ne.s32.totalorder %s100, %s101
      %p112 = scmp.eq.s32.totalorder %s17, 0
      %p113 = por %p111, %p112
      %p114 = scmp.ne.s32.totalorder %s100, %s101
      %p115 = scmp.eq.s32.totalorder %s18, 3
      %p116 = por %p114, %p115
      %p118 = scmp.ne.s32.totalorder %s101, %s117
      %p119 = scmp.eq.s32.totalorder %s18, 0
      %p120 = por %p118, %p119
      %s121 = ssub.s32 %s19, %s38
      %s122 = ssub.s32 %s20, %s34
      %s123 = sor.u32 %s121, %s122
      %p124 = scmp.eq.s32.totalorder %s123, 0
      %s126 = sadd.s32 %s125, 1
      %s127 = scalar_select %p124, %s125, %s126
      %p130 = pneg %p124
      %p131 = scmp.eq.s32.totalorder %s12, 3
      %p132 = por %p130, %p131
      %p133 = scmp.ne.s32.totalorder %s125, %s128
      %p134 = scmp.eq.s32.totalorder %s12, 0
      %p135 = por %p133, %p134
      %p136 = scmp.ne.s32.totalorder %s125, %s128
      %p137 = scmp.eq.s32.totalorder %s17, 3
      %p138 = por %p136, %p137
      %p139 = scmp.ne.s32.totalorder %s128, %s129
      %p140 = scmp.eq.s32.totalorder %s17, 0
      %p141 = por %p139, %p140
      %p142 = scmp.ne.s32.totalorder %s128, %s129
      %p143 = scmp.eq.s32.totalorder %s18, 3
      %p144 = por %p142, %p143
      %p146 = scmp.ne.s32.totalorder %s129, %s145
      %p147 = scmp.eq.s32.totalorder %s18, 0
      %p148 = por %p146, %p147
      %p149 = scmp.le.s32.totalorder 1, %s12
      %p150 = scmp.lt.s32.totalorder %s12, 5
      %p151 = pnand %p149, %p150
      %p152 = pneg %p151
      // Predicated region
      $region9: #{tpu_custom_call.1} parent=5 // pred_check
        _
      $region10: #{tpu_custom_call.1} parent=5 // pred_check_branch
        %154 = sbr.rel (%p151) target = $region12
      $region11: #{tpu_custom_call.1} parent=5 // pred_region
        %s155 = ssub.s32 %s12, 1
        // Predicated region
        $region13: #{tpu_custom_call.1} parent=11 // pred_check
          %p156 = pneg %p87
        $region14: #{tpu_custom_call.1} parent=11 // pred_check_branch
          %158 = sbr.rel (%p156) target = $region16
        $region15: #{tpu_custom_call.1} parent=11 // pred_region
          %s159 = smul.u32 32, %s24
          %p160 = scmp.lt.s32.totalorder %s159, 31
          %s161 = scalar_select %p160, %s159, 31
          %p162 = scmp.lt.s32.totalorder %s23, 0
          %s163 = scalar_select %p162, %s23, 0
          %s164 = sadd.s32 %s163, %s161
          %s165 = smul.addr %s164, 4
          %s166 = scalar_lea.vmem %s1, %s165
          %s167 = smul.u32 32, %s24
        $region16: #{tpu_custom_call.1} parent=11 // pred_fallthru
          _
        // Predicated region
        $region17: #{tpu_custom_call.1} parent=11 // pred_check
          %p168 = pneg %p113
        $region18: #{tpu_custom_call.1} parent=11 // pred_check_branch
          %170 = sbr.rel (%p168) target = $region20
        $region19: #{tpu_custom_call.1} parent=11 // pred_region
          %p171 = scmp.lt.s32.totalorder %s23, 0
          %s172 = scalar_select %p171, %s23, 0
          %s173 = scalar_lea.vmem %s2, %s172
        $region20: #{tpu_custom_call.1} parent=11 // pred_fallthru
          _
      $region12: #{tpu_custom_call.1} parent=5 // pred_fallthru
        _
      %p174 = scmp.lt.s32.totalorder %s12, 4
      // Predicated region
      $region21: #{tpu_custom_call.1} parent=5 // pred_check
        %p175 = pneg %p174
      $region22: #{tpu_custom_call.1} parent=5 // pred_check_branch
        %177 = sbr.rel (%p175) target = $region24
      $region23: #{tpu_custom_call.1} parent=5 // pred_region
        // Predicated region
        $region25: #{tpu_custom_call.1} parent=23 // pred_check
          %p178 = pneg %p53
        $region26: #{tpu_custom_call.1} parent=23 // pred_check_branch
          %180 = sbr.rel (%p178) target = $region28
        $region27: #{tpu_custom_call.1} parent=23 // pred_region
          %s181 = sand.u32 %s43, 1
          %s182 = scalar_lea.sflag [#allocation4], %s181
          %s183 = sand.u32 %s43, 1
          %s184 = smul.addr %s183, 512
          %s185 = scalar_lea.vmem [#allocation3], %s184
          %s186 = smul.u32 64, %s19
          %s187 = smul.u32 2, %s21
          %s189 = ssub.s32 8192, 8192
          %190 = vsyncadd %s182, %s189
          %s191 = smul.addr %s186, 2
          %s192 = sadd.s32 %s187, %s191
          %s193 = smul.addr %s192, 64
          %s194 = scalar_lea.hbm %s0, %s193
          %s195 = sshll.u32 %s185, 4
          %s196 = int_to_ptr.vmem [resolvable:$true] %s195
          %201 = dma.hbm_to_vmem [thread:$0]  %s194, 8192, %s196, %s182, 128, 128, 8
        $region28: #{tpu_custom_call.1} parent=23 // pred_fallthru
          _
      $region24: #{tpu_custom_call.1} parent=5 // pred_fallthru
        _
      %p202 = scmp.le.s32.totalorder 1, %s12
      %p203 = scmp.lt.s32.totalorder %s12, 5
      %p204 = pnand %p202, %p203
      %p205 = pneg %p204
      // Predicated region
      $region29: #{tpu_custom_call.1} parent=5 // pred_check
        _
      $region30: #{tpu_custom_call.1} parent=5 // pred_check_branch
        %207 = sbr.rel (%p204) target = $region32
      $region31: #{tpu_custom_call.1} parent=5 // pred_region
        %s208 = ssub.s32 %s12, 1
        %s209 = sand.u32 %s46, 1
        %s210 = scalar_lea.sflag [#allocation4], %s209
        %s211 = sand.u32 %s46, 1
        %s212 = smul.addr %s211, 512
        %s213 = scalar_lea.vmem [#allocation3], %s212
        // Predicated region
        $region33: #{tpu_custom_call.1} parent=31 // pred_check
          %p214 = pneg %p59
        $region34: #{tpu_custom_call.1} parent=31 // pred_check_branch
          %216 = sbr.rel (%p214) target = $region36
        $region35: #{tpu_custom_call.1} parent=31 // pred_region
          %217 = dma.done %s210, 8192
        $region36: #{tpu_custom_call.1} parent=31 // pred_fallthru
          _
        %s218 = sand.u32 %s46, 1
        %s219 = scalar_lea.sflag [#allocation4], %s218
        %s220 = sand.u32 %s46, 1
        %s221 = smul.addr %s220, 512
        %s222 = scalar_lea.vmem [#allocation3], %s221
        %p223 = pneg %p59
        %p224 = pneg %p56
        %s225 = smul.u32 32, %s24
        %p226 = scmp.lt.s32.totalorder %s225, 31
        %s227 = scalar_select %p226, %s225, 31
        %p228 = scmp.lt.s32.totalorder %s23, 0
        %s229 = scalar_select %p228, %s23, 0
        %s230 = sadd.s32 %s229, %s227
        %s231 = smul.addr %s230, 4
        %s232 = scalar_lea.vmem %s1, %s231
        %p233 = pneg %p87
        %p234 = pneg %p84
        %p235 = scmp.lt.s32.totalorder %s23, 0
        %s236 = scalar_select %p235, %s23, 0
        %s237 = scalar_lea.vmem %s2, %s236
        %p238 = pneg %p113
        %p239 = pneg %p110
        %p240 = pneg %p141
        %p241 = pneg %p138
        %s242 = smul.u32 64, %s22
        %p243 = scmp.lt.s32.totalorder %s242, 255
        %s244 = scalar_select %p243, %s242, 255
        %p245 = scmp.lt.s32.totalorder %s23, 0
        %s246 = scalar_select %p245, %s23, 0
        %s247 = sadd.s32 %s246, %s244
        %s248 = smul.addr %s247, 4
        %s249 = scalar_lea.vmem %s3, %s248
        %s250 = smul.u32 64, %s22
        %s251 = smul.u32 2, %s24
        %s252 = smul.u32 32, %s24
        %p253 = scmp.lt.s32.totalorder %s252, 31
        %s254 = scalar_select %p253, %s252, 31
        %p255 = scmp.lt.s32.totalorder %s23, 0
        %s256 = scalar_select %p255, %s23, 0
        %s257 = sadd.s32 %s256, %s254
        %s258 = smul.addr %s257, 4
        %s259 = scalar_lea.vmem %s1, %s258
        %s260 = smul.u32 32, %s24
        %p261 = scmp.lt.s32.totalorder %s23, 0
        %s262 = scalar_select %p261, %s23, 0
        %s263 = scalar_lea.vmem %s2, %s262
        %s264 = smul.u32 64, %s22
        %p265 = scmp.lt.s32.totalorder %s264, 255
        %s266 = scalar_select %p265, %s264, 255
        %p267 = scmp.lt.s32.totalorder %s23, 0
        %s268 = scalar_select %p267, %s23, 0
        %s269 = sadd.s32 %s268, %s266
        %s270 = smul.addr %s269, 4
        %s271 = scalar_lea.vmem %s3, %s270
        %s272 = smul.u32 64, %s22
        %p274 = scmp.eq.s32.totalorder %s24, 0
        // Predicated region
        $region37: #{tpu_custom_call.1} parent=31 // pred_check
          %p275 = pneg %p274
        $region38: #{tpu_custom_call.1} parent=31 // pred_check_branch
          %277 = sbr.rel (%p275) target = $region40
        $region39: #{tpu_custom_call.1} parent=31 // pred_region
          %vm278 = vcmask 523264
          %279 = vst.msk [vmem:[#allocation2] sm:$0xff] %vm278, 0.0
          %280 = vst.msk [vmem:[#allocation2 + $0x8] sm:$0xff] %vm278, 0.0
          %281 = vst.msk [vmem:[#allocation2 + $0x10] sm:$0xff] %vm278, 0.0
          %282 = vst.msk [vmem:[#allocation2 + $0x18] sm:$0xff] %vm278, 0.0
          %283 = vst.msk [vmem:[#allocation2 + $0x20] sm:$0xff] %vm278, 0.0
          %284 = vst.msk [vmem:[#allocation2 + $0x28] sm:$0xff] %vm278, 0.0
          %285 = vst.msk [vmem:[#allocation2 + $0x30] sm:$0xff] %vm278, 0.0
          %286 = vst.msk [vmem:[#allocation2 + $0x38] sm:$0xff] %vm278, 0.0
          %287 = vst.msk [vmem:[#allocation2 + $0x40] sm:$0xff] %vm278, 0.0
          %288 = vst.msk [vmem:[#allocation2 + $0x48] sm:$0xff] %vm278, 0.0
          %289 = vst.msk [vmem:[#allocation2 + $0x50] sm:$0xff] %vm278, 0.0
          %290 = vst.msk [vmem:[#allocation2 + $0x58] sm:$0xff] %vm278, 0.0
          %291 = vst.msk [vmem:[#allocation2 + $0x60] sm:$0xff] %vm278, 0.0
          %292 = vst.msk [vmem:[#allocation2 + $0x68] sm:$0xff] %vm278, 0.0
          %293 = vst.msk [vmem:[#allocation2 + $0x70] sm:$0xff] %vm278, 0.0
          %294 = vst.msk [vmem:[#allocation2 + $0x78] sm:$0xff] %vm278, 0.0
          %295 = vst.msk [vmem:[#allocation2 + $0x80] sm:$0xff] %vm278, 0.0
          %296 = vst.msk [vmem:[#allocation2 + $0x88] sm:$0xff] %vm278, 0.0
          %297 = vst.msk [vmem:[#allocation2 + $0x90] sm:$0xff] %vm278, 0.0
          %298 = vst.msk [vmem:[#allocation2 + $0x98] sm:$0xff] %vm278, 0.0
          %299 = vst.msk [vmem:[#allocation2 + $0xa0] sm:$0xff] %vm278, 0.0
          %300 = vst.msk [vmem:[#allocation2 + $0xa8] sm:$0xff] %vm278, 0.0
          %301 = vst.msk [vmem:[#allocation2 + $0xb0] sm:$0xff] %vm278, 0.0
          %302 = vst.msk [vmem:[#allocation2 + $0xb8] sm:$0xff] %vm278, 0.0
          %303 = vst.msk [vmem:[#allocation2 + $0xc0] sm:$0xff] %vm278, 0.0
          %304 = vst.msk [vmem:[#allocation2 + $0xc8] sm:$0xff] %vm278, 0.0
          %305 = vst.msk [vmem:[#allocation2 + $0xd0] sm:$0xff] %vm278, 0.0
          %306 = vst.msk [vmem:[#allocation2 + $0xd8] sm:$0xff] %vm278, 0.0
          %307 = vst.msk [vmem:[#allocation2 + $0xe0] sm:$0xff] %vm278, 0.0
          %308 = vst.msk [vmem:[#allocation2 + $0xe8] sm:$0xff] %vm278, 0.0
          %309 = vst.msk [vmem:[#allocation2 + $0xf0] sm:$0xff] %vm278, 0.0
          %310 = vst.msk [vmem:[#allocation2 + $0xf8] sm:$0xff] %vm278, 0.0
          %311 = vst.msk [vmem:[#allocation2 + $0x100] sm:$0xff] %vm278, 0.0
          %312 = vst.msk [vmem:[#allocation2 + $0x108] sm:$0xff] %vm278, 0.0
          %313 = vst.msk [vmem:[#allocation2 + $0x110] sm:$0xff] %vm278, 0.0
          %314 = vst.msk [vmem:[#allocation2 + $0x118] sm:$0xff] %vm278, 0.0
          %315 = vst.msk [vmem:[#allocation2 + $0x120] sm:$0xff] %vm278, 0.0
          %316 = vst.msk [vmem:[#allocation2 + $0x128] sm:$0xff] %vm278, 0.0
          %317 = vst.msk [vmem:[#allocation2 + $0x130] sm:$0xff] %vm278, 0.0
          %318 = vst.msk [vmem:[#allocation2 + $0x138] sm:$0xff] %vm278, 0.0
          %319 = vst.msk [vmem:[#allocation2 + $0x140] sm:$0xff] %vm278, 0.0
          %320 = vst.msk [vmem:[#allocation2 + $0x148] sm:$0xff] %vm278, 0.0
          %321 = vst.msk [vmem:[#allocation2 + $0x150] sm:$0xff] %vm278, 0.0
          %322 = vst.msk [vmem:[#allocation2 + $0x158] sm:$0xff] %vm278, 0.0
          %323 = vst.msk [vmem:[#allocation2 + $0x160] sm:$0xff] %vm278, 0.0
          %324 = vst.msk [vmem:[#allocation2 + $0x168] sm:$0xff] %vm278, 0.0
          %325 = vst.msk [vmem:[#allocation2 + $0x170] sm:$0xff] %vm278, 0.0
          %326 = vst.msk [vmem:[#allocation2 + $0x178] sm:$0xff] %vm278, 0.0
          %327 = vst.msk [vmem:[#allocation2 + $0x180] sm:$0xff] %vm278, 0.0
          %328 = vst.msk [vmem:[#allocation2 + $0x188] sm:$0xff] %vm278, 0.0
          %329 = vst.msk [vmem:[#allocation2 + $0x190] sm:$0xff] %vm278, 0.0
          %330 = vst.msk [vmem:[#allocation2 + $0x198] sm:$0xff] %vm278, 0.0
          %331 = vst.msk [vmem:[#allocation2 + $0x1a0] sm:$0xff] %vm278, 0.0
          %332 = vst.msk [vmem:[#allocation2 + $0x1a8] sm:$0xff] %vm278, 0.0
          %333 = vst.msk [vmem:[#allocation2 + $0x1b0] sm:$0xff] %vm278, 0.0
          %334 = vst.msk [vmem:[#allocation2 + $0x1b8] sm:$0xff] %vm278, 0.0
          %335 = vst.msk [vmem:[#allocation2 + $0x1c0] sm:$0xff] %vm278, 0.0
          %336 = vst.msk [vmem:[#allocation2 + $0x1c8] sm:$0xff] %vm278, 0.0
          %337 = vst.msk [vmem:[#allocation2 + $0x1d0] sm:$0xff] %vm278, 0.0
          %338 = vst.msk [vmem:[#allocation2 + $0x1d8] sm:$0xff] %vm278, 0.0
          %339 = vst.msk [vmem:[#allocation2 + $0x1e0] sm:$0xff] %vm278, 0.0
          %340 = vst.msk [vmem:[#allocation2 + $0x1e8] sm:$0xff] %vm278, 0.0
          %341 = vst.msk [vmem:[#allocation2 + $0x1f0] sm:$0xff] %vm278, 0.0
          %342 = vst.msk [vmem:[#allocation2 + $0x1f8] sm:$0xff] %vm278, 0.0
        $region40: #{tpu_custom_call.1} parent=31 // pred_fallthru
          _
        %v343 = vld [vmem:[#allocation2] sm:$0xff]
        %v344 = vld [vmem:[#allocation2 + $0x8] sm:$0xff]
        %v345 = vld [vmem:[#allocation2 + $0x10] sm:$0xff]
        %v346 = vld [vmem:[#allocation2 + $0x18] sm:$0xff]
        %v347 = vld [vmem:[#allocation2 + $0x20] sm:$0xff]
        %v348 = vld [vmem:[#allocation2 + $0x28] sm:$0xff]
        %v349 = vld [vmem:[#allocation2 + $0x30] sm:$0xff]
        %v350 = vld [vmem:[#allocation2 + $0x38] sm:$0xff]
        %v351 = vld [vmem:[#allocation2 + $0x40] sm:$0xff]
        %v352 = vld [vmem:[#allocation2 + $0x48] sm:$0xff]
        %v353 = vld [vmem:[#allocation2 + $0x50] sm:$0xff]
        %v354 = vld [vmem:[#allocation2 + $0x58] sm:$0xff]
        %v355 = vld [vmem:[#allocation2 + $0x60] sm:$0xff]
        %v356 = vld [vmem:[#allocation2 + $0x68] sm:$0xff]
        %v357 = vld [vmem:[#allocation2 + $0x70] sm:$0xff]
        %v358 = vld [vmem:[#allocation2 + $0x78] sm:$0xff]
        %v359 = vld [vmem:[#allocation2 + $0x80] sm:$0xff]
        %v360 = vld [vmem:[#allocation2 + $0x88] sm:$0xff]
        %v361 = vld [vmem:[#allocation2 + $0x90] sm:$0xff]
        %v362 = vld [vmem:[#allocation2 + $0x98] sm:$0xff]
        %v363 = vld [vmem:[#allocation2 + $0xa0] sm:$0xff]
        %v364 = vld [vmem:[#allocation2 + $0xa8] sm:$0xff]
        %v365 = vld [vmem:[#allocation2 + $0xb0] sm:$0xff]
        %v366 = vld [vmem:[#allocation2 + $0xb8] sm:$0xff]
        %v367 = vld [vmem:[#allocation2 + $0xc0] sm:$0xff]
        %v368 = vld [vmem:[#allocation2 + $0xc8] sm:$0xff]
        %v369 = vld [vmem:[#allocation2 + $0xd0] sm:$0xff]
        %v370 = vld [vmem:[#allocation2 + $0xd8] sm:$0xff]
        %v371 = vld [vmem:[#allocation2 + $0xe0] sm:$0xff]
        %v372 = vld [vmem:[#allocation2 + $0xe8] sm:$0xff]
        %v373 = vld [vmem:[#allocation2 + $0xf0] sm:$0xff]
        %v374 = vld [vmem:[#allocation2 + $0xf8] sm:$0xff]
        %v375 = vld [vmem:[#allocation2 + $0x100] sm:$0xff]
        %v376 = vld [vmem:[#allocation2 + $0x108] sm:$0xff]
        %v377 = vld [vmem:[#allocation2 + $0x110] sm:$0xff]
        %v378 = vld [vmem:[#allocation2 + $0x118] sm:$0xff]
        %v379 = vld [vmem:[#allocation2 + $0x120] sm:$0xff]
        %v380 = vld [vmem:[#allocation2 + $0x128] sm:$0xff]
        %v381 = vld [vmem:[#allocation2 + $0x130] sm:$0xff]
        %v382 = vld [vmem:[#allocation2 + $0x138] sm:$0xff]
        %v383 = vld [vmem:[#allocation2 + $0x140] sm:$0xff]
        %v384 = vld [vmem:[#allocation2 + $0x148] sm:$0xff]
        %v385 = vld [vmem:[#allocation2 + $0x150] sm:$0xff]
        %v386 = vld [vmem:[#allocation2 + $0x158] sm:$0xff]
        %v387 = vld [vmem:[#allocation2 + $0x160] sm:$0xff]
        %v388 = vld [vmem:[#allocation2 + $0x168] sm:$0xff]
        %v389 = vld [vmem:[#allocation2 + $0x170] sm:$0xff]
        %v390 = vld [vmem:[#allocation2 + $0x178] sm:$0xff]
        %v391 = vld [vmem:[#allocation2 + $0x180] sm:$0xff]
        %v392 = vld [vmem:[#allocation2 + $0x188] sm:$0xff]
        %v393 = vld [vmem:[#allocation2 + $0x190] sm:$0xff]
        %v394 = vld [vmem:[#allocation2 + $0x198] sm:$0xff]
        %v395 = vld [vmem:[#allocation2 + $0x1a0] sm:$0xff]
        %v396 = vld [vmem:[#allocation2 + $0x1a8] sm:$0xff]
        %v397 = vld [vmem:[#allocation2 + $0x1b0] sm:$0xff]
        %v398 = vld [vmem:[#allocation2 + $0x1b8] sm:$0xff]
        %v399 = vld [vmem:[#allocation2 + $0x1c0] sm:$0xff]
        %v400 = vld [vmem:[#allocation2 + $0x1c8] sm:$0xff]
        %v401 = vld [vmem:[#allocation2 + $0x1d0] sm:$0xff]
        %v402 = vld [vmem:[#allocation2 + $0x1d8] sm:$0xff]
        %v403 = vld [vmem:[#allocation2 + $0x1e0] sm:$0xff]
        %v404 = vld [vmem:[#allocation2 + $0x1e8] sm:$0xff]
        %v405 = vld [vmem:[#allocation2 + $0x1f0] sm:$0xff]
        %v406 = vld [vmem:[#allocation2 + $0x1f8] sm:$0xff]
        %v407 = vld [vmem:[%s213] sm:$0xff]
        %v408 = vld [vmem:[%s213 + $0x8] sm:$0xff]
        %v409 = vld [vmem:[%s213 + $0x10] sm:$0xff]
        %v410 = vld [vmem:[%s213 + $0x18] sm:$0xff]
        %v411 = vld [vmem:[%s213 + $0x20] sm:$0xff]
        %v412 = vld [vmem:[%s213 + $0x28] sm:$0xff]
        %v413 = vld [vmem:[%s213 + $0x30] sm:$0xff]
        %v414 = vld [vmem:[%s213 + $0x38] sm:$0xff]
        %v415 = vld [vmem:[%s213 + $0x40] sm:$0xff]
        %v416 = vld [vmem:[%s213 + $0x48] sm:$0xff]
        %v417 = vld [vmem:[%s213 + $0x50] sm:$0xff]
        %v418 = vld [vmem:[%s213 + $0x58] sm:$0xff]
        %v419 = vld [vmem:[%s213 + $0x60] sm:$0xff]
        %v420 = vld [vmem:[%s213 + $0x68] sm:$0xff]
        %v421 = vld [vmem:[%s213 + $0x70] sm:$0xff]
        %v422 = vld [vmem:[%s213 + $0x78] sm:$0xff]
        %v423 = vld [vmem:[%s213 + $0x80] sm:$0xff]
        %v424 = vld [vmem:[%s213 + $0x88] sm:$0xff]
        %v425 = vld [vmem:[%s213 + $0x90] sm:$0xff]
        %v426 = vld [vmem:[%s213 + $0x98] sm:$0xff]
        %v427 = vld [vmem:[%s213 + $0xa0] sm:$0xff]
        %v428 = vld [vmem:[%s213 + $0xa8] sm:$0xff]
        %v429 = vld [vmem:[%s213 + $0xb0] sm:$0xff]
        %v430 = vld [vmem:[%s213 + $0xb8] sm:$0xff]
        %v431 = vld [vmem:[%s213 + $0xc0] sm:$0xff]
        %v432 = vld [vmem:[%s213 + $0xc8] sm:$0xff]
        %v433 = vld [vmem:[%s213 + $0xd0] sm:$0xff]
        %v434 = vld [vmem:[%s213 + $0xd8] sm:$0xff]
        %v435 = vld [vmem:[%s213 + $0xe0] sm:$0xff]
        %v436 = vld [vmem:[%s213 + $0xe8] sm:$0xff]
        %v437 = vld [vmem:[%s213 + $0xf0] sm:$0xff]
        %v438 = vld [vmem:[%s213 + $0xf8] sm:$0xff]
        %v439 = vld [vmem:[%s213 + $0x100] sm:$0xff]
        %v440 = vld [vmem:[%s213 + $0x108] sm:$0xff]
        %v441 = vld [vmem:[%s213 + $0x110] sm:$0xff]
        %v442 = vld [vmem:[%s213 + $0x118] sm:$0xff]
        %v443 = vld [vmem:[%s213 + $0x120] sm:$0xff]
        %v444 = vld [vmem:[%s213 + $0x128] sm:$0xff]
        %v445 = vld [vmem:[%s213 + $0x130] sm:$0xff]
        %v446 = vld [vmem:[%s213 + $0x138] sm:$0xff]
        %v447 = vld [vmem:[%s213 + $0x140] sm:$0xff]
        %v448 = vld [vmem:[%s213 + $0x148] sm:$0xff]
        %v449 = vld [vmem:[%s213 + $0x150] sm:$0xff]
        %v450 = vld [vmem:[%s213 + $0x158] sm:$0xff]
        %v451 = vld [vmem:[%s213 + $0x160] sm:$0xff]
        %v452 = vld [vmem:[%s213 + $0x168] sm:$0xff]
        %v453 = vld [vmem:[%s213 + $0x170] sm:$0xff]
        %v454 = vld [vmem:[%s213 + $0x178] sm:$0xff]
        %v455 = vld [vmem:[%s213 + $0x180] sm:$0xff]
        %v456 = vld [vmem:[%s213 + $0x188] sm:$0xff]
        %v457 = vld [vmem:[%s213 + $0x190] sm:$0xff]
        %v458 = vld [vmem:[%s213 + $0x198] sm:$0xff]
        %v459 = vld [vmem:[%s213 + $0x1a0] sm:$0xff]
        %v460 = vld [vmem:[%s213 + $0x1a8] sm:$0xff]
        %v461 = vld [vmem:[%s213 + $0x1b0] sm:$0xff]
        %v462 = vld [vmem:[%s213 + $0x1b8] sm:$0xff]
        %v463 = vld [vmem:[%s213 + $0x1c0] sm:$0xff]
        %v464 = vld [vmem:[%s213 + $0x1c8] sm:$0xff]
        %v465 = vld [vmem:[%s213 + $0x1d0] sm:$0xff]
        %v466 = vld [vmem:[%s213 + $0x1d8] sm:$0xff]
        %v467 = vld [vmem:[%s213 + $0x1e0] sm:$0xff]
        %v468 = vld [vmem:[%s213 + $0x1e8] sm:$0xff]
        %v469 = vld [vmem:[%s213 + $0x1f0] sm:$0xff]
        %v470 = vld [vmem:[%s213 + $0x1f8] sm:$0xff]
        %v471 = vld [vmem:[%s259] sm:$0xf]
        %v472 = vld [vmem:[%s259 + $0x4] sm:$0xf]
        %v473 = vld [vmem:[%s259 + $0x8] sm:$0xf]
        %v474 = vld [vmem:[%s259 + $0xc] sm:$0xf]
        %v475 = vld [vmem:[%s259 + $0x10] sm:$0xf]
        %v476 = vld [vmem:[%s259 + $0x14] sm:$0xf]
        %v477 = vld [vmem:[%s259 + $0x18] sm:$0xf]
        %v478 = vld [vmem:[%s259 + $0x1c] sm:$0xf]
        %v479 = vld [vmem:[%s259 + $0x20] sm:$0xf]
        %v480 = vld [vmem:[%s259 + $0x24] sm:$0xf]
        %v481 = vld [vmem:[%s259 + $0x28] sm:$0xf]
        %v482 = vld [vmem:[%s259 + $0x2c] sm:$0xf]
        %v483 = vld [vmem:[%s259 + $0x30] sm:$0xf]
        %v484 = vld [vmem:[%s259 + $0x34] sm:$0xf]
        %v485 = vld [vmem:[%s259 + $0x38] sm:$0xf]
        %v486 = vld [vmem:[%s259 + $0x3c] sm:$0xf]
        %v487 = vld [vmem:[%s259 + $0x40] sm:$0xf]
        %v488 = vld [vmem:[%s259 + $0x44] sm:$0xf]
        %v489 = vld [vmem:[%s259 + $0x48] sm:$0xf]
        %v490 = vld [vmem:[%s259 + $0x4c] sm:$0xf]
        %v491 = vld [vmem:[%s259 + $0x50] sm:$0xf]
        %v492 = vld [vmem:[%s259 + $0x54] sm:$0xf]
        %v493 = vld [vmem:[%s259 + $0x58] sm:$0xf]
        %v494 = vld [vmem:[%s259 + $0x5c] sm:$0xf]
        %v495 = vld [vmem:[%s259 + $0x60] sm:$0xf]
        %v496 = vld [vmem:[%s259 + $0x64] sm:$0xf]
        %v497 = vld [vmem:[%s259 + $0x68] sm:$0xf]
        %v498 = vld [vmem:[%s259 + $0x6c] sm:$0xf]
        %v499 = vld [vmem:[%s259 + $0x70] sm:$0xf]
        %v500 = vld [vmem:[%s259 + $0x74] sm:$0xf]
        %v501 = vld [vmem:[%s259 + $0x78] sm:$0xf]
        %v502 = vld [vmem:[%s259 + $0x7c] sm:$0xf]
        %v567 = vunpack.c.l.b16 %v407
        %v568 = vunpack.c.h.b16 %v407
        %v569 = vunpack.c.l.b16 %v408
        %v570 = vunpack.c.h.b16 %v408
        %v571 = vunpack.c.l.b16 %v409
        %v572 = vunpack.c.h.b16 %v409
        %v573 = vunpack.c.l.b16 %v410
        %v574 = vunpack.c.h.b16 %v410
        %v575 = vunpack.c.l.b16 %v411
        %v576 = vunpack.c.h.b16 %v411
        %v577 = vunpack.c.l.b16 %v412
        %v578 = vunpack.c.h.b16 %v412
        %v579 = vunpack.c.l.b16 %v413
        %v580 = vunpack.c.h.b16 %v413
        %v581 = vunpack.c.l.b16 %v414
        %v582 = vunpack.c.h.b16 %v414
        %v583 = vunpack.c.l.b16 %v415
        %v584 = vunpack.c.h.b16 %v415
        %v585 = vunpack.c.l.b16 %v416
        %v586 = vunpack.c.h.b16 %v416
        %v587 = vunpack.c.l.b16 %v417
        %v588 = vunpack.c.h.b16 %v417
        %v589 = vunpack.c.l.b16 %v418
        %v590 = vunpack.c.h.b16 %v418
        %v591 = vunpack.c.l.b16 %v419
        %v592 = vunpack.c.h.b16 %v419
        %v593 = vunpack.c.l.b16 %v420
        %v594 = vunpack.c.h.b16 %v420
        %v595 = vunpack.c.l.b16 %v421
        %v596 = vunpack.c.h.b16 %v421
        %v597 = vunpack.c.l.b16 %v422
        %v598 = vunpack.c.h.b16 %v422
        %v599 = vunpack.c.l.b16 %v423
        %v600 = vunpack.c.h.b16 %v423
        %v601 = vunpack.c.l.b16 %v424
        %v602 = vunpack.c.h.b16 %v424
        %v603 = vunpack.c.l.b16 %v425
        %v604 = vunpack.c.h.b16 %v425
        %v605 = vunpack.c.l.b16 %v426
        %v606 = vunpack.c.h.b16 %v426
        %v607 = vunpack.c.l.b16 %v427
        %v608 = vunpack.c.h.b16 %v427
        %v609 = vunpack.c.l.b16 %v428
        %v610 = vunpack.c.h.b16 %v428
        %v611 = vunpack.c.l.b16 %v429
        %v612 = vunpack.c.h.b16 %v429
        %v613 = vunpack.c.l.b16 %v430
        %v614 = vunpack.c.h.b16 %v430
        %v615 = vunpack.c.l.b16 %v431
        %v616 = vunpack.c.h.b16 %v431
        %v617 = vunpack.c.l.b16 %v432
        %v618 = vunpack.c.h.b16 %v432
        %v619 = vunpack.c.l.b16 %v433
        %v620 = vunpack.c.h.b16 %v433
        %v621 = vunpack.c.l.b16 %v434
        %v622 = vunpack.c.h.b16 %v434
        %v623 = vunpack.c.l.b16 %v435
        %v624 = vunpack.c.h.b16 %v435
        %v625 = vunpack.c.l.b16 %v436
        %v626 = vunpack.c.h.b16 %v436
        %v627 = vunpack.c.l.b16 %v437
        %v628 = vunpack.c.h.b16 %v437
        %v629 = vunpack.c.l.b16 %v438
        %v630 = vunpack.c.h.b16 %v438
        %v631 = vunpack.c.l.b16 %v439
        %v632 = vunpack.c.h.b16 %v439
        %v633 = vunpack.c.l.b16 %v440
        %v634 = vunpack.c.h.b16 %v440
        %v635 = vunpack.c.l.b16 %v441
        %v636 = vunpack.c.h.b16 %v441
        %v637 = vunpack.c.l.b16 %v442
        %v638 = vunpack.c.h.b16 %v442
        %v639 = vunpack.c.l.b16 %v443
        %v640 = vunpack.c.h.b16 %v443
        %v641 = vunpack.c.l.b16 %v444
        %v642 = vunpack.c.h.b16 %v444
        %v643 = vunpack.c.l.b16 %v445
        %v644 = vunpack.c.h.b16 %v445
        %v645 = vunpack.c.l.b16 %v446
        %v646 = vunpack.c.h.b16 %v446
        %v647 = vunpack.c.l.b16 %v447
        %v648 = vunpack.c.h.b16 %v447
        %v649 = vunpack.c.l.b16 %v448
        %v650 = vunpack.c.h.b16 %v448
        %v651 = vunpack.c.l.b16 %v449
        %v652 = vunpack.c.h.b16 %v449
        %v653 = vunpack.c.l.b16 %v450
        %v654 = vunpack.c.h.b16 %v450
        %v655 = vunpack.c.l.b16 %v451
        %v656 = vunpack.c.h.b16 %v451
        %v657 = vunpack.c.l.b16 %v452
        %v658 = vunpack.c.h.b16 %v452
        %v659 = vunpack.c.l.b16 %v453
        %v660 = vunpack.c.h.b16 %v453
        %v661 = vunpack.c.l.b16 %v454
        %v662 = vunpack.c.h.b16 %v454
        %v663 = vunpack.c.l.b16 %v455
        %v664 = vunpack.c.h.b16 %v455
        %v665 = vunpack.c.l.b16 %v456
        %v666 = vunpack.c.h.b16 %v456
        %v667 = vunpack.c.l.b16 %v457
        %v668 = vunpack.c.h.b16 %v457
        %v669 = vunpack.c.l.b16 %v458
        %v670 = vunpack.c.h.b16 %v458
        %v671 = vunpack.c.l.b16 %v459
        %v672 = vunpack.c.h.b16 %v459
        %v673 = vunpack.c.l.b16 %v460
        %v674 = vunpack.c.h.b16 %v460
        %v675 = vunpack.c.l.b16 %v461
        %v676 = vunpack.c.h.b16 %v461
        %v677 = vunpack.c.l.b16 %v462
        %v678 = vunpack.c.h.b16 %v462
        %v679 = vunpack.c.l.b16 %v463
        %v680 = vunpack.c.h.b16 %v463
        %v681 = vunpack.c.l.b16 %v464
        %v682 = vunpack.c.h.b16 %v464
        %v683 = vunpack.c.l.b16 %v465
        %v684 = vunpack.c.h.b16 %v465
        %v685 = vunpack.c.l.b16 %v466
        %v686 = vunpack.c.h.b16 %v466
        %v687 = vunpack.c.l.b16 %v467
        %v688 = vunpack.c.h.b16 %v467
        %v689 = vunpack.c.l.b16 %v468
        %v690 = vunpack.c.h.b16 %v468
        %v691 = vunpack.c.l.b16 %v469
        %v692 = vunpack.c.h.b16 %v469
        %v693 = vunpack.c.l.b16 %v470
        %v694 = vunpack.c.h.b16 %v470
        %v695 = vpack.c.b16 %v569, %v567
        %v696 = vpack.c.b16 %v570, %v568
        %v697 = vpack.c.b16 %v573, %v571
        %v698 = vpack.c.b16 %v574, %v572
        %v699 = vpack.c.b16 %v577, %v575
        %v700 = vpack.c.b16 %v578, %v576
        %v701 = vpack.c.b16 %v581, %v579
        %v702 = vpack.c.b16 %v582, %v580
        %v703 = vpack.c.b16 %v585, %v583
        %v704 = vpack.c.b16 %v586, %v584
        %v705 = vpack.c.b16 %v589, %v587
        %v706 = vpack.c.b16 %v590, %v588
        %v707 = vpack.c.b16 %v593, %v591
        %v708 = vpack.c.b16 %v594, %v592
        %v709 = vpack.c.b16 %v597, %v595
        %v710 = vpack.c.b16 %v598, %v596
        %v711 = vpack.c.b16 %v601, %v599
        %v712 = vpack.c.b16 %v602, %v600
        %v713 = vpack.c.b16 %v605, %v603
        %v714 = vpack.c.b16 %v606, %v604
        %v715 = vpack.c.b16 %v609, %v607
        %v716 = vpack.c.b16 %v610, %v608
        %v717 = vpack.c.b16 %v613, %v611
        %v718 = vpack.c.b16 %v614, %v612
        %v719 = vpack.c.b16 %v617, %v615
        %v720 = vpack.c.b16 %v618, %v616
        %v721 = vpack.c.b16 %v621, %v619
        %v722 = vpack.c.b16 %v622, %v620
        %v723 = vpack.c.b16 %v625, %v623
        %v724 = vpack.c.b16 %v626, %v624
        %v725 = vpack.c.b16 %v629, %v627
        %v726 = vpack.c.b16 %v630, %v628
        %v727 = vpack.c.b16 %v633, %v631
        %v728 = vpack.c.b16 %v634, %v632
        %v729 = vpack.c.b16 %v637, %v635
        %v730 = vpack.c.b16 %v638, %v636
        %v731 = vpack.c.b16 %v641, %v639
        %v732 = vpack.c.b16 %v642, %v640
        %v733 = vpack.c.b16 %v645, %v643
        %v734 = vpack.c.b16 %v646, %v644
        %v735 = vpack.c.b16 %v649, %v647
        %v736 = vpack.c.b16 %v650, %v648
        %v737 = vpack.c.b16 %v653, %v651
        %v738 = vpack.c.b16 %v654, %v652
        %v739 = vpack.c.b16 %v657, %v655
        %v740 = vpack.c.b16 %v658, %v656
        %v741 = vpack.c.b16 %v661, %v659
        %v742 = vpack.c.b16 %v662, %v660
        %v743 = vpack.c.b16 %v665, %v663
        %v744 = vpack.c.b16 %v666, %v664
        %v745 = vpack.c.b16 %v669, %v667
        %v746 = vpack.c.b16 %v670, %v668
        %v747 = vpack.c.b16 %v673, %v671
        %v748 = vpack.c.b16 %v674, %v672
        %v749 = vpack.c.b16 %v677, %v675
        %v750 = vpack.c.b16 %v678, %v676
        %v751 = vpack.c.b16 %v681, %v679
        %v752 = vpack.c.b16 %v682, %v680
        %v753 = vpack.c.b16 %v685, %v683
        %v754 = vpack.c.b16 %v686, %v684
        %v755 = vpack.c.b16 %v689, %v687
        %v756 = vpack.c.b16 %v690, %v688
        %v757 = vpack.c.b16 %v693, %v691
        %v758 = vpack.c.b16 %v694, %v692
        %v855 = vunpack.c.l.b16 %v471
        %v856 = vunpack.c.l.b16 %v472
        %v857 = vunpack.c.l.b16 %v473
        %v858 = vunpack.c.l.b16 %v474
        %v859 = vunpack.c.l.b16 %v475
        %v860 = vunpack.c.l.b16 %v476
        %v861 = vunpack.c.l.b16 %v477
        %v862 = vunpack.c.l.b16 %v478
        %v863 = vunpack.c.l.b16 %v479
        %v864 = vunpack.c.l.b16 %v480
        %v865 = vunpack.c.l.b16 %v481
        %v866 = vunpack.c.l.b16 %v482
        %v867 = vunpack.c.l.b16 %v483
        %v868 = vunpack.c.l.b16 %v484
        %v869 = vunpack.c.l.b16 %v485
        %v870 = vunpack.c.l.b16 %v486
        %v871 = vunpack.c.l.b16 %v487
        %v872 = vunpack.c.l.b16 %v488
        %v873 = vunpack.c.l.b16 %v489
        %v874 = vunpack.c.l.b16 %v490
        %v875 = vunpack.c.l.b16 %v491
        %v876 = vunpack.c.l.b16 %v492
        %v877 = vunpack.c.l.b16 %v493
        %v878 = vunpack.c.l.b16 %v494
        %v879 = vunpack.c.l.b16 %v495
        %v880 = vunpack.c.l.b16 %v496
        %v881 = vunpack.c.l.b16 %v497
        %v882 = vunpack.c.l.b16 %v498
        %v883 = vunpack.c.l.b16 %v499
        %v884 = vunpack.c.l.b16 %v500
        %v885 = vunpack.c.l.b16 %v501
        %v886 = vunpack.c.l.b16 %v502
        %v887 = vpack.c.b16 %v856, %v855
        %v888 = vpack.c.b16 %v858, %v857
        %v889 = vpack.c.b16 %v860, %v859
        %v890 = vpack.c.b16 %v862, %v861
        %v891 = vpack.c.b16 %v864, %v863
        %v892 = vpack.c.b16 %v866, %v865
        %v893 = vpack.c.b16 %v868, %v867
        %v894 = vpack.c.b16 %v870, %v869
        %v895 = vpack.c.b16 %v872, %v871
        %v896 = vpack.c.b16 %v874, %v873
        %v897 = vpack.c.b16 %v876, %v875
        %v898 = vpack.c.b16 %v878, %v877
        %v899 = vpack.c.b16 %v880, %v879
        %v900 = vpack.c.b16 %v882, %v881
        %v901 = vpack.c.b16 %v884, %v883
        %v902 = vpack.c.b16 %v886, %v885
        %919 = vmatprep.subr.bf16.mxu0 0
        %920 = vmatpush1.bf16.msra.mxu0 %v894
        %921 = vmatprep.subr.bf16.mxu0 0
        %922 = vmatpush1.bf16.msra.mxu0 %v893
        %923 = vmatprep.subr.bf16.mxu0 0
        %924 = vmatpush1.bf16.msra.mxu0 %v892
        %925 = vmatprep.subr.bf16.mxu0 0
        %926 = vmatpush1.bf16.msra.mxu0 %v891
        %927 = vmatprep.subr.bf16.mxu0 0
        %928 = vmatpush1.bf16.msra.mxu0 %v890
        %929 = vmatprep.subr.bf16.mxu0 0
        %930 = vmatpush1.bf16.msra.mxu0 %v889
        %931 = vmatprep.subr.bf16.mxu0 0
        %932 = vmatpush1.bf16.msra.mxu0 %v888
        %933 = vmatprep.subr.bf16.mxu0 0
        %934 = vmatpush1.bf16.msra.mxu0 %v887
        %935 = vmatprep.subr.bf16.mxu0 0
        %936 = vmatpush2.bf16.msra.mxu0 %v902
        %937 = vmatprep.subr.bf16.mxu0 0
        %938 = vmatpush2.bf16.msra.mxu0 %v901
        %939 = vmatprep.subr.bf16.mxu0 0
        %940 = vmatpush2.bf16.msra.mxu0 %v900
        %941 = vmatprep.subr.bf16.mxu0 0
        %942 = vmatpush2.bf16.msra.mxu0 %v899
        %943 = vmatprep.subr.bf16.mxu0 0
        %944 = vmatpush2.bf16.msra.mxu0 %v898
        %945 = vmatprep.subr.bf16.mxu0 0
        %946 = vmatpush2.bf16.msra.mxu0 %v897
        %947 = vmatprep.subr.bf16.mxu0 0
        %948 = vmatpush2.bf16.msra.mxu0 %v896
        %949 = vmatprep.subr.bf16.mxu0 0
        %950 = vmatpush2.bf16.msra.mxu0 %v895
        %951 = vmatprep.mubr.bf16.mxu0 %v696
        %952 = vmatmul.mubr.bf16.gmra.mxu0 %v695
        %v953 = vpop.f32.mrf.mxu0
        %v954 = vadd.f32 0.0, %v953
        %v955 = vpop.f32.mrf.mxu0
        %v956 = vpop.f32.mrf.mxu0
        %v957 = vadd.f32 0.0, %v956
        %v958 = vpop.f32.mrf.mxu0
        %959 = vmatprep.mubr.bf16.mxu0 %v698
        %960 = vmatmul.mubr.bf16.gmra.mxu0 %v697
        %v961 = vpop.f32.mrf.mxu0
        %v962 = vadd.f32 0.0, %v961
        %v963 = vpop.f32.mrf.mxu0
        %v964 = vpop.f32.mrf.mxu0
        %v965 = vadd.f32 0.0, %v964
        %v966 = vpop.f32.mrf.mxu0
        %967 = vmatprep.mubr.bf16.mxu0 %v700
        %968 = vmatmul.mubr.bf16.gmra.mxu0 %v699
        %v969 = vpop.f32.mrf.mxu0
        %v970 = vadd.f32 0.0, %v969
        %v971 = vpop.f32.mrf.mxu0
        %v972 = vpop.f32.mrf.mxu0
        %v973 = vadd.f32 0.0, %v972
        %v974 = vpop.f32.mrf.mxu0
        %975 = vmatprep.mubr.bf16.mxu0 %v702
        %976 = vmatmul.mubr.bf16.gmra.mxu0 %v701
        %v977 = vpop.f32.mrf.mxu0
        %v978 = vadd.f32 0.0, %v977
        %v979 = vpop.f32.mrf.mxu0
        %v980 = vpop.f32.mrf.mxu0
        %v981 = vadd.f32 0.0, %v980
        %v982 = vpop.f32.mrf.mxu0
        %983 = vmatprep.mubr.bf16.mxu0 %v704
        %984 = vmatmul.mubr.bf16.gmra.mxu0 %v703
        %v985 = vpop.f32.mrf.mxu0
        %v986 = vadd.f32 0.0, %v985
        %v987 = vpop.f32.mrf.mxu0
        %v988 = vpop.f32.mrf.mxu0
        %v989 = vadd.f32 0.0, %v988
        %v990 = vpop.f32.mrf.mxu0
        %991 = vmatprep.mubr.bf16.mxu0 %v706
        %992 = vmatmul.mubr.bf16.gmra.mxu0 %v705
        %v993 = vpop.f32.mrf.mxu0
        %v994 = vadd.f32 0.0, %v993
        %v995 = vpop.f32.mrf.mxu0
        %v996 = vpop.f32.mrf.mxu0
        %v997 = vadd.f32 0.0, %v996
        %v998 = vpop.f32.mrf.mxu0
        %999 = vmatprep.mubr.bf16.mxu0 %v708
        %1000 = vmatmul.mubr.bf16.gmra.mxu0 %v707
        %v1001 = vpop.f32.mrf.mxu0
        %v1002 = vadd.f32 0.0, %v1001
        %v1003 = vpop.f32.mrf.mxu0
        %v1004 = vpop.f32.mrf.mxu0
        %v1005 = vadd.f32 0.0, %v1004
        %v1006 = vpop.f32.mrf.mxu0
        %1007 = vmatprep.mubr.bf16.mxu0 %v710
        %1008 = vmatmul.mubr.bf16.gmra.mxu0 %v709
        %v1009 = vpop.f32.mrf.mxu0
        %v1010 = vadd.f32 0.0, %v1009
        %v1011 = vpop.f32.mrf.mxu0
        %v1012 = vpop.f32.mrf.mxu0
        %v1013 = vadd.f32 0.0, %v1012
        %v1014 = vpop.f32.mrf.mxu0
        %1015 = vmatprep.mubr.bf16.mxu0 %v712
        %1016 = vmatmul.mubr.bf16.gmra.mxu0 %v711
        %v1017 = vpop.f32.mrf.mxu0
        %v1018 = vadd.f32 0.0, %v1017
        %v1019 = vpop.f32.mrf.mxu0
        %v1020 = vpop.f32.mrf.mxu0
        %v1021 = vadd.f32 0.0, %v1020
        %v1022 = vpop.f32.mrf.mxu0
        %1023 = vmatprep.mubr.bf16.mxu0 %v714
        %1024 = vmatmul.mubr.bf16.gmra.mxu0 %v713
        %v1025 = vpop.f32.mrf.mxu0
        %v1026 = vadd.f32 0.0, %v1025
        %v1027 = vpop.f32.mrf.mxu0
        %v1028 = vpop.f32.mrf.mxu0
        %v1029 = vadd.f32 0.0, %v1028
        %v1030 = vpop.f32.mrf.mxu0
        %1031 = vmatprep.mubr.bf16.mxu0 %v716
        %1032 = vmatmul.mubr.bf16.gmra.mxu0 %v715
        %v1033 = vpop.f32.mrf.mxu0
        %v1034 = vadd.f32 0.0, %v1033
        %v1035 = vpop.f32.mrf.mxu0
        %v1036 = vpop.f32.mrf.mxu0
        %v1037 = vadd.f32 0.0, %v1036
        %v1038 = vpop.f32.mrf.mxu0
        %1039 = vmatprep.mubr.bf16.mxu0 %v718
        %1040 = vmatmul.mubr.bf16.gmra.mxu0 %v717
        %v1041 = vpop.f32.mrf.mxu0
        %v1042 = vadd.f32 0.0, %v1041
        %v1043 = vpop.f32.mrf.mxu0
        %v1044 = vpop.f32.mrf.mxu0
        %v1045 = vadd.f32 0.0, %v1044
        %v1046 = vpop.f32.mrf.mxu0
        %1047 = vmatprep.mubr.bf16.mxu0 %v720
        %1048 = vmatmul.mubr.bf16.gmra.mxu0 %v719
        %v1049 = vpop.f32.mrf.mxu0
        %v1050 = vadd.f32 0.0, %v1049
        %v1051 = vpop.f32.mrf.mxu0
        %v1052 = vpop.f32.mrf.mxu0
        %v1053 = vadd.f32 0.0, %v1052
        %v1054 = vpop.f32.mrf.mxu0
        %1055 = vmatprep.mubr.bf16.mxu0 %v722
        %1056 = vmatmul.mubr.bf16.gmra.mxu0 %v721
        %v1057 = vpop.f32.mrf.mxu0
        %v1058 = vadd.f32 0.0, %v1057
        %v1059 = vpop.f32.mrf.mxu0
        %v1060 = vpop.f32.mrf.mxu0
        %v1061 = vadd.f32 0.0, %v1060
        %v1062 = vpop.f32.mrf.mxu0
        %1063 = vmatprep.mubr.bf16.mxu0 %v724
        %1064 = vmatmul.mubr.bf16.gmra.mxu0 %v723
        %v1065 = vpop.f32.mrf.mxu0
        %v1066 = vadd.f32 0.0, %v1065
        %v1067 = vpop.f32.mrf.mxu0
        %v1068 = vpop.f32.mrf.mxu0
        %v1069 = vadd.f32 0.0, %v1068
        %v1070 = vpop.f32.mrf.mxu0
        %1071 = vmatprep.mubr.bf16.mxu0 %v726
        %1072 = vmatmul.mubr.bf16.gmra.mxu0 %v725
        %v1073 = vpop.f32.mrf.mxu0
        %v1074 = vadd.f32 0.0, %v1073
        %v1075 = vpop.f32.mrf.mxu0
        %v1076 = vpop.f32.mrf.mxu0
        %v1077 = vadd.f32 0.0, %v1076
        %v1078 = vpop.f32.mrf.mxu0
        %1079 = vmatprep.mubr.bf16.mxu0 %v728
        %1080 = vmatmul.mubr.bf16.gmra.mxu0 %v727
        %v1081 = vpop.f32.mrf.mxu0
        %v1082 = vadd.f32 0.0, %v1081
        %v1083 = vpop.f32.mrf.mxu0
        %v1084 = vpop.f32.mrf.mxu0
        %v1085 = vadd.f32 0.0, %v1084
        %v1086 = vpop.f32.mrf.mxu0
        %1087 = vmatprep.mubr.bf16.mxu0 %v730
        %1088 = vmatmul.mubr.bf16.gmra.mxu0 %v729
        %v1089 = vpop.f32.mrf.mxu0
        %v1090 = vadd.f32 0.0, %v1089
        %v1091 = vpop.f32.mrf.mxu0
        %v1092 = vpop.f32.mrf.mxu0
        %v1093 = vadd.f32 0.0, %v1092
        %v1094 = vpop.f32.mrf.mxu0
        %1095 = vmatprep.mubr.bf16.mxu0 %v732
        %1096 = vmatmul.mubr.bf16.gmra.mxu0 %v731
        %v1097 = vpop.f32.mrf.mxu0
        %v1098 = vadd.f32 0.0, %v1097
        %v1099 = vpop.f32.mrf.mxu0
        %v1100 = vpop.f32.mrf.mxu0
        %v1101 = vadd.f32 0.0, %v1100
        %v1102 = vpop.f32.mrf.mxu0
        %1103 = vmatprep.mubr.bf16.mxu0 %v734
        %1104 = vmatmul.mubr.bf16.gmra.mxu0 %v733
        %v1105 = vpop.f32.mrf.mxu0
        %v1106 = vadd.f32 0.0, %v1105
        %v1107 = vpop.f32.mrf.mxu0
        %v1108 = vpop.f32.mrf.mxu0
        %v1109 = vadd.f32 0.0, %v1108
        %v1110 = vpop.f32.mrf.mxu0
        %1111 = vmatprep.mubr.bf16.mxu0 %v736
        %1112 = vmatmul.mubr.bf16.gmra.mxu0 %v735
        %v1113 = vpop.f32.mrf.mxu0
        %v1114 = vadd.f32 0.0, %v1113
        %v1115 = vpop.f32.mrf.mxu0
        %v1116 = vpop.f32.mrf.mxu0
        %v1117 = vadd.f32 0.0, %v1116
        %v1118 = vpop.f32.mrf.mxu0
        %1119 = vmatprep.mubr.bf16.mxu0 %v738
        %1120 = vmatmul.mubr.bf16.gmra.mxu0 %v737
        %v1121 = vpop.f32.mrf.mxu0
        %v1122 = vadd.f32 0.0, %v1121
        %v1123 = vpop.f32.mrf.mxu0
        %v1124 = vpop.f32.mrf.mxu0
        %v1125 = vadd.f32 0.0, %v1124
        %v1126 = vpop.f32.mrf.mxu0
        %1127 = vmatprep.mubr.bf16.mxu0 %v740
        %1128 = vmatmul.mubr.bf16.gmra.mxu0 %v739
        %v1129 = vpop.f32.mrf.mxu0
        %v1130 = vadd.f32 0.0, %v1129
        %v1131 = vpop.f32.mrf.mxu0
        %v1132 = vpop.f32.mrf.mxu0
        %v1133 = vadd.f32 0.0, %v1132
        %v1134 = vpop.f32.mrf.mxu0
        %1135 = vmatprep.mubr.bf16.mxu0 %v742
        %1136 = vmatmul.mubr.bf16.gmra.mxu0 %v741
        %v1137 = vpop.f32.mrf.mxu0
        %v1138 = vadd.f32 0.0, %v1137
        %v1139 = vpop.f32.mrf.mxu0
        %v1140 = vpop.f32.mrf.mxu0
        %v1141 = vadd.f32 0.0, %v1140
        %v1142 = vpop.f32.mrf.mxu0
        %1143 = vmatprep.mubr.bf16.mxu0 %v744
        %1144 = vmatmul.mubr.bf16.gmra.mxu0 %v743
        %v1145 = vpop.f32.mrf.mxu0
        %v1146 = vadd.f32 0.0, %v1145
        %v1147 = vpop.f32.mrf.mxu0
        %v1148 = vpop.f32.mrf.mxu0
        %v1149 = vadd.f32 0.0, %v1148
        %v1150 = vpop.f32.mrf.mxu0
        %1151 = vmatprep.mubr.bf16.mxu0 %v746
        %1152 = vmatmul.mubr.bf16.gmra.mxu0 %v745
        %v1153 = vpop.f32.mrf.mxu0
        %v1154 = vadd.f32 0.0, %v1153
        %v1155 = vpop.f32.mrf.mxu0
        %v1156 = vpop.f32.mrf.mxu0
        %v1157 = vadd.f32 0.0, %v1156
        %v1158 = vpop.f32.mrf.mxu0
        %1159 = vmatprep.mubr.bf16.mxu0 %v748
        %1160 = vmatmul.mubr.bf16.gmra.mxu0 %v747
        %v1161 = vpop.f32.mrf.mxu0
        %v1162 = vadd.f32 0.0, %v1161
        %v1163 = vpop.f32.mrf.mxu0
        %v1164 = vpop.f32.mrf.mxu0
        %v1165 = vadd.f32 0.0, %v1164
        %v1166 = vpop.f32.mrf.mxu0
        %1167 = vmatprep.mubr.bf16.mxu0 %v750
        %1168 = vmatmul.mubr.bf16.gmra.mxu0 %v749
        %v1169 = vpop.f32.mrf.mxu0
        %v1170 = vadd.f32 0.0, %v1169
        %v1171 = vpop.f32.mrf.mxu0
        %v1172 = vpop.f32.mrf.mxu0
        %v1173 = vadd.f32 0.0, %v1172
        %v1174 = vpop.f32.mrf.mxu0
        %1175 = vmatprep.mubr.bf16.mxu0 %v752
        %1176 = vmatmul.mubr.bf16.gmra.mxu0 %v751
        %v1177 = vpop.f32.mrf.mxu0
        %v1178 = vadd.f32 0.0, %v1177
        %v1179 = vpop.f32.mrf.mxu0
        %v1180 = vpop.f32.mrf.mxu0
        %v1181 = vadd.f32 0.0, %v1180
        %v1182 = vpop.f32.mrf.mxu0
        %1183 = vmatprep.mubr.bf16.mxu0 %v754
        %1184 = vmatmul.mubr.bf16.gmra.mxu0 %v753
        %v1185 = vpop.f32.mrf.mxu0
        %v1186 = vadd.f32 0.0, %v1185
        %v1187 = vpop.f32.mrf.mxu0
        %v1188 = vpop.f32.mrf.mxu0
        %v1189 = vadd.f32 0.0, %v1188
        %v1190 = vpop.f32.mrf.mxu0
        %1191 = vmatprep.mubr.bf16.mxu0 %v756
        %1192 = vmatmul.mubr.bf16.gmra.mxu0 %v755
        %v1193 = vpop.f32.mrf.mxu0
        %v1194 = vadd.f32 0.0, %v1193
        %v1195 = vpop.f32.mrf.mxu0
        %v1196 = vpop.f32.mrf.mxu0
        %v1197 = vadd.f32 0.0, %v1196
        %v1198 = vpop.f32.mrf.mxu0
        %1199 = vmatprep.mubr.bf16.mxu0 %v758
        %1200 = vmatmul.mubr.bf16.gmra.mxu0 %v757
        %v1201 = vpop.f32.mrf.mxu0
        %v1202 = vadd.f32 0.0, %v1201
        %v1203 = vpop.f32.mrf.mxu0
        %v1204 = vpop.f32.mrf.mxu0
        %v1205 = vadd.f32 0.0, %v1204
        %v1206 = vpop.f32.mrf.mxu0
        %1207 = vdwg.mxu0
        %v1208 = vadd.f32 %v343, %v954
        %v1209 = vadd.f32 %v344, %v957
        %v1210 = vadd.f32 %v345, %v962
        %v1211 = vadd.f32 %v346, %v965
        %v1212 = vadd.f32 %v347, %v970
        %v1213 = vadd.f32 %v348, %v973
        %v1214 = vadd.f32 %v349, %v978
        %v1215 = vadd.f32 %v350, %v981
        %v1216 = vadd.f32 %v351, %v986
        %v1217 = vadd.f32 %v352, %v989
        %v1218 = vadd.f32 %v353, %v994
        %v1219 = vadd.f32 %v354, %v997
        %v1220 = vadd.f32 %v355, %v1002
        %v1221 = vadd.f32 %v356, %v1005
        %v1222 = vadd.f32 %v357, %v1010
        %v1223 = vadd.f32 %v358, %v1013
        %v1224 = vadd.f32 %v359, %v1018
        %v1225 = vadd.f32 %v360, %v1021
        %v1226 = vadd.f32 %v361, %v1026
        %v1227 = vadd.f32 %v362, %v1029
        %v1228 = vadd.f32 %v363, %v1034
        %v1229 = vadd.f32 %v364, %v1037
        %v1230 = vadd.f32 %v365, %v1042
        %v1231 = vadd.f32 %v366, %v1045
        %v1232 = vadd.f32 %v367, %v1050
        %v1233 = vadd.f32 %v368, %v1053
        %v1234 = vadd.f32 %v369, %v1058
        %v1235 = vadd.f32 %v370, %v1061
        %v1236 = vadd.f32 %v371, %v1066
        %v1237 = vadd.f32 %v372, %v1069
        %v1238 = vadd.f32 %v373, %v1074
        %v1239 = vadd.f32 %v374, %v1077
        %v1240 = vadd.f32 %v375, %v1082
        %v1241 = vadd.f32 %v376, %v1085
        %v1242 = vadd.f32 %v377, %v1090
        %v1243 = vadd.f32 %v378, %v1093
        %v1244 = vadd.f32 %v379, %v1098
        %v1245 = vadd.f32 %v380, %v1101
        %v1246 = vadd.f32 %v381, %v1106
        %v1247 = vadd.f32 %v382, %v1109
        %v1248 = vadd.f32 %v383, %v1114
        %v1249 = vadd.f32 %v384, %v1117
        %v1250 = vadd.f32 %v385, %v1122
        %v1251 = vadd.f32 %v386, %v1125
        %v1252 = vadd.f32 %v387, %v1130
        %v1253 = vadd.f32 %v388, %v1133
        %v1254 = vadd.f32 %v389, %v1138
        %v1255 = vadd.f32 %v390, %v1141
        %v1256 = vadd.f32 %v391, %v1146
        %v1257 = vadd.f32 %v392, %v1149
        %v1258 = vadd.f32 %v393, %v1154
        %v1259 = vadd.f32 %v394, %v1157
        %v1260 = vadd.f32 %v395, %v1162
        %v1261 = vadd.f32 %v396, %v1165
        %v1262 = vadd.f32 %v397, %v1170
        %v1263 = vadd.f32 %v398, %v1173
        %v1264 = vadd.f32 %v399, %v1178
        %v1265 = vadd.f32 %v400, %v1181
        %v1266 = vadd.f32 %v401, %v1186
        %v1267 = vadd.f32 %v402, %v1189
        %v1268 = vadd.f32 %v403, %v1194
        %v1269 = vadd.f32 %v404, %v1197
        %v1270 = vadd.f32 %v405, %v1202
        %v1271 = vadd.f32 %v406, %v1205
        %vm1272 = vcmask 523264
        %1273 = vst.msk [vmem:[#allocation2] sm:$0xff] %vm1272, %v1208
        %1274 = vst.msk [vmem:[#allocation2 + $0x8] sm:$0xff] %vm1272, %v1209
        %1275 = vst.msk [vmem:[#allocation2 + $0x10] sm:$0xff] %vm1272, %v1210
        %1276 = vst.msk [vmem:[#allocation2 + $0x18] sm:$0xff] %vm1272, %v1211
        %1277 = vst.msk [vmem:[#allocation2 + $0x20] sm:$0xff] %vm1272, %v1212
        %1278 = vst.msk [vmem:[#allocation2 + $0x28] sm:$0xff] %vm1272, %v1213
        %1279 = vst.msk [vmem:[#allocation2 + $0x30] sm:$0xff] %vm1272, %v1214
        %1280 = vst.msk [vmem:[#allocation2 + $0x38] sm:$0xff] %vm1272, %v1215
        %1281 = vst.msk [vmem:[#allocation2 + $0x40] sm:$0xff] %vm1272, %v1216
        %1282 = vst.msk [vmem:[#allocation2 + $0x48] sm:$0xff] %vm1272, %v1217
        %1283 = vst.msk [vmem:[#allocation2 + $0x50] sm:$0xff] %vm1272, %v1218
        %1284 = vst.msk [vmem:[#allocation2 + $0x58] sm:$0xff] %vm1272, %v1219
        %1285 = vst.msk [vmem:[#allocation2 + $0x60] sm:$0xff] %vm1272, %v1220
        %1286 = vst.msk [vmem:[#allocation2 + $0x68] sm:$0xff] %vm1272, %v1221
        %1287 = vst.msk [vmem:[#allocation2 + $0x70] sm:$0xff] %vm1272, %v1222
        %1288 = vst.msk [vmem:[#allocation2 + $0x78] sm:$0xff] %vm1272, %v1223
        %1289 = vst.msk [vmem:[#allocation2 + $0x80] sm:$0xff] %vm1272, %v1224
        %1290 = vst.msk [vmem:[#allocation2 + $0x88] sm:$0xff] %vm1272, %v1225
        %1291 = vst.msk [vmem:[#allocation2 + $0x90] sm:$0xff] %vm1272, %v1226
        %1292 = vst.msk [vmem:[#allocation2 + $0x98] sm:$0xff] %vm1272, %v1227
        %1293 = vst.msk [vmem:[#allocation2 + $0xa0] sm:$0xff] %vm1272, %v1228
        %1294 = vst.msk [vmem:[#allocation2 + $0xa8] sm:$0xff] %vm1272, %v1229
        %1295 = vst.msk [vmem:[#allocation2 + $0xb0] sm:$0xff] %vm1272, %v1230
        %1296 = vst.msk [vmem:[#allocation2 + $0xb8] sm:$0xff] %vm1272, %v1231
        %1297 = vst.msk [vmem:[#allocation2 + $0xc0] sm:$0xff] %vm1272, %v1232
        %1298 = vst.msk [vmem:[#allocation2 + $0xc8] sm:$0xff] %vm1272, %v1233
        %1299 = vst.msk [vmem:[#allocation2 + $0xd0] sm:$0xff] %vm1272, %v1234
        %1300 = vst.msk [vmem:[#allocation2 + $0xd8] sm:$0xff] %vm1272, %v1235
        %1301 = vst.msk [vmem:[#allocation2 + $0xe0] sm:$0xff] %vm1272, %v1236
        %1302 = vst.msk [vmem:[#allocation2 + $0xe8] sm:$0xff] %vm1272, %v1237
        %1303 = vst.msk [vmem:[#allocation2 + $0xf0] sm:$0xff] %vm1272, %v1238
        %1304 = vst.msk [vmem:[#allocation2 + $0xf8] sm:$0xff] %vm1272, %v1239
        %1305 = vst.msk [vmem:[#allocation2 + $0x100] sm:$0xff] %vm1272, %v1240
        %1306 = vst.msk [vmem:[#allocation2 + $0x108] sm:$0xff] %vm1272, %v1241
        %1307 = vst.msk [vmem:[#allocation2 + $0x110] sm:$0xff] %vm1272, %v1242
        %1308 = vst.msk [vmem:[#allocation2 + $0x118] sm:$0xff] %vm1272, %v1243
        %1309 = vst.msk [vmem:[#allocation2 + $0x120] sm:$0xff] %vm1272, %v1244
        %1310 = vst.msk [vmem:[#allocation2 + $0x128] sm:$0xff] %vm1272, %v1245
        %1311 = vst.msk [vmem:[#allocation2 + $0x130] sm:$0xff] %vm1272, %v1246
        %1312 = vst.msk [vmem:[#allocation2 + $0x138] sm:$0xff] %vm1272, %v1247
        %1313 = vst.msk [vmem:[#allocation2 + $0x140] sm:$0xff] %vm1272, %v1248
        %1314 = vst.msk [vmem:[#allocation2 + $0x148] sm:$0xff] %vm1272, %v1249
        %1315 = vst.msk [vmem:[#allocation2 + $0x150] sm:$0xff] %vm1272, %v1250
        %1316 = vst.msk [vmem:[#allocation2 + $0x158] sm:$0xff] %vm1272, %v1251
        %1317 = vst.msk [vmem:[#allocation2 + $0x160] sm:$0xff] %vm1272, %v1252
        %1318 = vst.msk [vmem:[#allocation2 + $0x168] sm:$0xff] %vm1272, %v1253
        %1319 = vst.msk [vmem:[#allocation2 + $0x170] sm:$0xff] %vm1272, %v1254
        %1320 = vst.msk [vmem:[#allocation2 + $0x178] sm:$0xff] %vm1272, %v1255
        %1321 = vst.msk [vmem:[#allocation2 + $0x180] sm:$0xff] %vm1272, %v1256
        %1322 = vst.msk [vmem:[#allocation2 + $0x188] sm:$0xff] %vm1272, %v1257
        %1323 = vst.msk [vmem:[#allocation2 + $0x190] sm:$0xff] %vm1272, %v1258
        %1324 = vst.msk [vmem:[#allocation2 + $0x198] sm:$0xff] %vm1272, %v1259
        %1325 = vst.msk [vmem:[#allocation2 + $0x1a0] sm:$0xff] %vm1272, %v1260
        %1326 = vst.msk [vmem:[#allocation2 + $0x1a8] sm:$0xff] %vm1272, %v1261
        %1327 = vst.msk [vmem:[#allocation2 + $0x1b0] sm:$0xff] %vm1272, %v1262
        %1328 = vst.msk [vmem:[#allocation2 + $0x1b8] sm:$0xff] %vm1272, %v1263
        %1329 = vst.msk [vmem:[#allocation2 + $0x1c0] sm:$0xff] %vm1272, %v1264
        %1330 = vst.msk [vmem:[#allocation2 + $0x1c8] sm:$0xff] %vm1272, %v1265
        %1331 = vst.msk [vmem:[#allocation2 + $0x1d0] sm:$0xff] %vm1272, %v1266
        %1332 = vst.msk [vmem:[#allocation2 + $0x1d8] sm:$0xff] %vm1272, %v1267
        %1333 = vst.msk [vmem:[#allocation2 + $0x1e0] sm:$0xff] %vm1272, %v1268
        %1334 = vst.msk [vmem:[#allocation2 + $0x1e8] sm:$0xff] %vm1272, %v1269
        %1335 = vst.msk [vmem:[#allocation2 + $0x1f0] sm:$0xff] %vm1272, %v1270
        %1336 = vst.msk [vmem:[#allocation2 + $0x1f8] sm:$0xff] %vm1272, %v1271
        // Predicated region
        $region41: #{tpu_custom_call.1} parent=31 // pred_check
          %p1337 = pneg %p274
        $region42: #{tpu_custom_call.1} parent=31 // pred_check_branch
          %1339 = sbr.rel (%p1337) target = $region44
        $region43: #{tpu_custom_call.1} parent=31 // pred_region
          %v1340 = vld [vmem:[#allocation2] sm:$0xff]
          %v1341 = vld [vmem:[#allocation2 + $0x8] sm:$0xff]
          %v1342 = vld [vmem:[#allocation2 + $0x10] sm:$0xff]
          %v1343 = vld [vmem:[#allocation2 + $0x18] sm:$0xff]
          %v1344 = vld [vmem:[#allocation2 + $0x20] sm:$0xff]
          %v1345 = vld [vmem:[#allocation2 + $0x28] sm:$0xff]
          %v1346 = vld [vmem:[#allocation2 + $0x30] sm:$0xff]
          %v1347 = vld [vmem:[#allocation2 + $0x38] sm:$0xff]
          %v1348 = vld [vmem:[#allocation2 + $0x40] sm:$0xff]
          %v1349 = vld [vmem:[#allocation2 + $0x48] sm:$0xff]
          %v1350 = vld [vmem:[#allocation2 + $0x50] sm:$0xff]
          %v1351 = vld [vmem:[#allocation2 + $0x58] sm:$0xff]
          %v1352 = vld [vmem:[#allocation2 + $0x60] sm:$0xff]
          %v1353 = vld [vmem:[#allocation2 + $0x68] sm:$0xff]
          %v1354 = vld [vmem:[#allocation2 + $0x70] sm:$0xff]
          %v1355 = vld [vmem:[#allocation2 + $0x78] sm:$0xff]
          %v1356 = vld [vmem:[#allocation2 + $0x80] sm:$0xff]
          %v1357 = vld [vmem:[#allocation2 + $0x88] sm:$0xff]
          %v1358 = vld [vmem:[#allocation2 + $0x90] sm:$0xff]
          %v1359 = vld [vmem:[#allocation2 + $0x98] sm:$0xff]
          %v1360 = vld [vmem:[#allocation2 + $0xa0] sm:$0xff]
          %v1361 = vld [vmem:[#allocation2 + $0xa8] sm:$0xff]
          %v1362 = vld [vmem:[#allocation2 + $0xb0] sm:$0xff]
          %v1363 = vld [vmem:[#allocation2 + $0xb8] sm:$0xff]
          %v1364 = vld [vmem:[#allocation2 + $0xc0] sm:$0xff]
          %v1365 = vld [vmem:[#allocation2 + $0xc8] sm:$0xff]
          %v1366 = vld [vmem:[#allocation2 + $0xd0] sm:$0xff]
          %v1367 = vld [vmem:[#allocation2 + $0xd8] sm:$0xff]
          %v1368 = vld [vmem:[#allocation2 + $0xe0] sm:$0xff]
          %v1369 = vld [vmem:[#allocation2 + $0xe8] sm:$0xff]
          %v1370 = vld [vmem:[#allocation2 + $0xf0] sm:$0xff]
          %v1371 = vld [vmem:[#allocation2 + $0xf8] sm:$0xff]
          %v1372 = vld [vmem:[#allocation2 + $0x100] sm:$0xff]
          %v1373 = vld [vmem:[#allocation2 + $0x108] sm:$0xff]
          %v1374 = vld [vmem:[#allocation2 + $0x110] sm:$0xff]
          %v1375 = vld [vmem:[#allocation2 + $0x118] sm:$0xff]
          %v1376 = vld [vmem:[#allocation2 + $0x120] sm:$0xff]
          %v1377 = vld [vmem:[#allocation2 + $0x128] sm:$0xff]
          %v1378 = vld [vmem:[#allocation2 + $0x130] sm:$0xff]
          %v1379 = vld [vmem:[#allocation2 + $0x138] sm:$0xff]
          %v1380 = vld [vmem:[#allocation2 + $0x140] sm:$0xff]
          %v1381 = vld [vmem:[#allocation2 + $0x148] sm:$0xff]
          %v1382 = vld [vmem:[#allocation2 + $0x150] sm:$0xff]
          %v1383 = vld [vmem:[#allocation2 + $0x158] sm:$0xff]
          %v1384 = vld [vmem:[#allocation2 + $0x160] sm:$0xff]
          %v1385 = vld [vmem:[#allocation2 + $0x168] sm:$0xff]
          %v1386 = vld [vmem:[#allocation2 + $0x170] sm:$0xff]
          %v1387 = vld [vmem:[#allocation2 + $0x178] sm:$0xff]
          %v1388 = vld [vmem:[#allocation2 + $0x180] sm:$0xff]
          %v1389 = vld [vmem:[#allocation2 + $0x188] sm:$0xff]
          %v1390 = vld [vmem:[#allocation2 + $0x190] sm:$0xff]
          %v1391 = vld [vmem:[#allocation2 + $0x198] sm:$0xff]
          %v1392 = vld [vmem:[#allocation2 + $0x1a0] sm:$0xff]
          %v1393 = vld [vmem:[#allocation2 + $0x1a8] sm:$0xff]
          %v1394 = vld [vmem:[#allocation2 + $0x1b0] sm:$0xff]
          %v1395 = vld [vmem:[#allocation2 + $0x1b8] sm:$0xff]
          %v1396 = vld [vmem:[#allocation2 + $0x1c0] sm:$0xff]
          %v1397 = vld [vmem:[#allocation2 + $0x1c8] sm:$0xff]
          %v1398 = vld [vmem:[#allocation2 + $0x1d0] sm:$0xff]
          %v1399 = vld [vmem:[#allocation2 + $0x1d8] sm:$0xff]
          %v1400 = vld [vmem:[#allocation2 + $0x1e0] sm:$0xff]
          %v1401 = vld [vmem:[#allocation2 + $0x1e8] sm:$0xff]
          %v1402 = vld [vmem:[#allocation2 + $0x1f0] sm:$0xff]
          %v1403 = vld [vmem:[#allocation2 + $0x1f8] sm:$0xff]
          %v1404 = vld [vmem:[%s263] sm:$0x1]
          %v1406 = vlaneseq
          %v1407 = vshrl.u32 %v1406, 7
          %v1408 = vsub.s32 0, %v1407
          %v1409 = vrot.slane %v1404, %v1408
          %v1411 = vadd.f32 %v1340, %v1409
          %v1412 = vadd.f32 %v1341, %v1409
          %v1413 = vadd.f32 %v1342, %v1409
          %v1414 = vadd.f32 %v1343, %v1409
          %v1415 = vadd.f32 %v1344, %v1409
          %v1416 = vadd.f32 %v1345, %v1409
          %v1417 = vadd.f32 %v1346, %v1409
          %v1418 = vadd.f32 %v1347, %v1409
          %v1419 = vadd.f32 %v1348, %v1409
          %v1420 = vadd.f32 %v1349, %v1409
          %v1421 = vadd.f32 %v1350, %v1409
          %v1422 = vadd.f32 %v1351, %v1409
          %v1423 = vadd.f32 %v1352, %v1409
          %v1424 = vadd.f32 %v1353, %v1409
          %v1425 = vadd.f32 %v1354, %v1409
          %v1426 = vadd.f32 %v1355, %v1409
          %v1427 = vadd.f32 %v1356, %v1409
          %v1428 = vadd.f32 %v1357, %v1409
          %v1429 = vadd.f32 %v1358, %v1409
          %v1430 = vadd.f32 %v1359, %v1409
          %v1431 = vadd.f32 %v1360, %v1409
          %v1432 = vadd.f32 %v1361, %v1409
          %v1433 = vadd.f32 %v1362, %v1409
          %v1434 = vadd.f32 %v1363, %v1409
          %v1435 = vadd.f32 %v1364, %v1409
          %v1436 = vadd.f32 %v1365, %v1409
          %v1437 = vadd.f32 %v1366, %v1409
          %v1438 = vadd.f32 %v1367, %v1409
          %v1439 = vadd.f32 %v1368, %v1409
          %v1440 = vadd.f32 %v1369, %v1409
          %v1441 = vadd.f32 %v1370, %v1409
          %v1442 = vadd.f32 %v1371, %v1409
          %v1443 = vadd.f32 %v1372, %v1409
          %v1444 = vadd.f32 %v1373, %v1409
          %v1445 = vadd.f32 %v1374, %v1409
          %v1446 = vadd.f32 %v1375, %v1409
          %v1447 = vadd.f32 %v1376, %v1409
          %v1448 = vadd.f32 %v1377, %v1409
          %v1449 = vadd.f32 %v1378, %v1409
          %v1450 = vadd.f32 %v1379, %v1409
          %v1451 = vadd.f32 %v1380, %v1409
          %v1452 = vadd.f32 %v1381, %v1409
          %v1453 = vadd.f32 %v1382, %v1409
          %v1454 = vadd.f32 %v1383, %v1409
          %v1455 = vadd.f32 %v1384, %v1409
          %v1456 = vadd.f32 %v1385, %v1409
          %v1457 = vadd.f32 %v1386, %v1409
          %v1458 = vadd.f32 %v1387, %v1409
          %v1459 = vadd.f32 %v1388, %v1409
          %v1460 = vadd.f32 %v1389, %v1409
          %v1461 = vadd.f32 %v1390, %v1409
          %v1462 = vadd.f32 %v1391, %v1409
          %v1463 = vadd.f32 %v1392, %v1409
          %v1464 = vadd.f32 %v1393, %v1409
          %v1465 = vadd.f32 %v1394, %v1409
          %v1466 = vadd.f32 %v1395, %v1409
          %v1467 = vadd.f32 %v1396, %v1409
          %v1468 = vadd.f32 %v1397, %v1409
          %v1469 = vadd.f32 %v1398, %v1409
          %v1470 = vadd.f32 %v1399, %v1409
          %v1471 = vadd.f32 %v1400, %v1409
          %v1472 = vadd.f32 %v1401, %v1409
          %v1473 = vadd.f32 %v1402, %v1409
          %v1474 = vadd.f32 %v1403, %v1409
          %v1475 = vmax.f32 %v1411, 0.0
          %v1476 = vmax.f32 %v1412, 0.0
          %v1477 = vmax.f32 %v1413, 0.0
          %v1478 = vmax.f32 %v1414, 0.0
          %v1479 = vmax.f32 %v1415, 0.0
          %v1480 = vmax.f32 %v1416, 0.0
          %v1481 = vmax.f32 %v1417, 0.0
          %v1482 = vmax.f32 %v1418, 0.0
          %v1483 = vmax.f32 %v1419, 0.0
          %v1484 = vmax.f32 %v1420, 0.0
          %v1485 = vmax.f32 %v1421, 0.0
          %v1486 = vmax.f32 %v1422, 0.0
          %v1487 = vmax.f32 %v1423, 0.0
          %v1488 = vmax.f32 %v1424, 0.0
          %v1489 = vmax.f32 %v1425, 0.0
          %v1490 = vmax.f32 %v1426, 0.0
          %v1491 = vmax.f32 %v1427, 0.0
          %v1492 = vmax.f32 %v1428, 0.0
          %v1493 = vmax.f32 %v1429, 0.0
          %v1494 = vmax.f32 %v1430, 0.0
          %v1495 = vmax.f32 %v1431, 0.0
          %v1496 = vmax.f32 %v1432, 0.0
          %v1497 = vmax.f32 %v1433, 0.0
          %v1498 = vmax.f32 %v1434, 0.0
          %v1499 = vmax.f32 %v1435, 0.0
          %v1500 = vmax.f32 %v1436, 0.0
          %v1501 = vmax.f32 %v1437, 0.0
          %v1502 = vmax.f32 %v1438, 0.0
          %v1503 = vmax.f32 %v1439, 0.0
          %v1504 = vmax.f32 %v1440, 0.0
          %v1505 = vmax.f32 %v1441, 0.0
          %v1506 = vmax.f32 %v1442, 0.0
          %v1507 = vmax.f32 %v1443, 0.0
          %v1508 = vmax.f32 %v1444, 0.0
          %v1509 = vmax.f32 %v1445, 0.0
          %v1510 = vmax.f32 %v1446, 0.0
          %v1511 = vmax.f32 %v1447, 0.0
          %v1512 = vmax.f32 %v1448, 0.0
          %v1513 = vmax.f32 %v1449, 0.0
          %v1514 = vmax.f32 %v1450, 0.0
          %v1515 = vmax.f32 %v1451, 0.0
          %v1516 = vmax.f32 %v1452, 0.0
          %v1517 = vmax.f32 %v1453, 0.0
          %v1518 = vmax.f32 %v1454, 0.0
          %v1519 = vmax.f32 %v1455, 0.0
          %v1520 = vmax.f32 %v1456, 0.0
          %v1521 = vmax.f32 %v1457, 0.0
          %v1522 = vmax.f32 %v1458, 0.0
          %v1523 = vmax.f32 %v1459, 0.0
          %v1524 = vmax.f32 %v1460, 0.0
          %v1525 = vmax.f32 %v1461, 0.0
          %v1526 = vmax.f32 %v1462, 0.0
          %v1527 = vmax.f32 %v1463, 0.0
          %v1528 = vmax.f32 %v1464, 0.0
          %v1529 = vmax.f32 %v1465, 0.0
          %v1530 = vmax.f32 %v1466, 0.0
          %v1531 = vmax.f32 %v1467, 0.0
          %v1532 = vmax.f32 %v1468, 0.0
          %v1533 = vmax.f32 %v1469, 0.0
          %v1534 = vmax.f32 %v1470, 0.0
          %v1535 = vmax.f32 %v1471, 0.0
          %v1536 = vmax.f32 %v1472, 0.0
          %v1537 = vmax.f32 %v1473, 0.0
          %v1538 = vmax.f32 %v1474, 0.0
          %v1539 = vpack.c.bf16 %v1476, %v1475
          %v1540 = vpack.c.bf16 %v1478, %v1477
          %v1541 = vpack.c.bf16 %v1480, %v1479
          %v1542 = vpack.c.bf16 %v1482, %v1481
          %v1543 = vpack.c.bf16 %v1484, %v1483
          %v1544 = vpack.c.bf16 %v1486, %v1485
          %v1545 = vpack.c.bf16 %v1488, %v1487
          %v1546 = vpack.c.bf16 %v1490, %v1489
          %v1547 = vpack.c.bf16 %v1492, %v1491
          %v1548 = vpack.c.bf16 %v1494, %v1493
          %v1549 = vpack.c.bf16 %v1496, %v1495
          %v1550 = vpack.c.bf16 %v1498, %v1497
          %v1551 = vpack.c.bf16 %v1500, %v1499
          %v1552 = vpack.c.bf16 %v1502, %v1501
          %v1553 = vpack.c.bf16 %v1504, %v1503
          %v1554 = vpack.c.bf16 %v1506, %v1505
          %v1555 = vpack.c.bf16 %v1508, %v1507
          %v1556 = vpack.c.bf16 %v1510, %v1509
          %v1557 = vpack.c.bf16 %v1512, %v1511
          %v1558 = vpack.c.bf16 %v1514, %v1513
          %v1559 = vpack.c.bf16 %v1516, %v1515
          %v1560 = vpack.c.bf16 %v1518, %v1517
          %v1561 = vpack.c.bf16 %v1520, %v1519
          %v1562 = vpack.c.bf16 %v1522, %v1521
          %v1563 = vpack.c.bf16 %v1524, %v1523
          %v1564 = vpack.c.bf16 %v1526, %v1525
          %v1565 = vpack.c.bf16 %v1528, %v1527
          %v1566 = vpack.c.bf16 %v1530, %v1529
          %v1567 = vpack.c.bf16 %v1532, %v1531
          %v1568 = vpack.c.bf16 %v1534, %v1533
          %v1569 = vpack.c.bf16 %v1536, %v1535
          %v1570 = vpack.c.bf16 %v1538, %v1537
          %v1603 = vunpack.c.l.b16 %v1539
          %v1604 = vunpack.c.h.b16 %v1539
          %v1605 = vunpack.c.l.b16 %v1540
          %v1606 = vunpack.c.h.b16 %v1540
          %v1607 = vunpack.c.l.b16 %v1541
          %v1608 = vunpack.c.h.b16 %v1541
          %v1609 = vunpack.c.l.b16 %v1542
          %v1610 = vunpack.c.h.b16 %v1542
          %v1611 = vunpack.c.l.b16 %v1543
          %v1612 = vunpack.c.h.b16 %v1543
          %v1613 = vunpack.c.l.b16 %v1544
          %v1614 = vunpack.c.h.b16 %v1544
          %v1615 = vunpack.c.l.b16 %v1545
          %v1616 = vunpack.c.h.b16 %v1545
          %v1617 = vunpack.c.l.b16 %v1546
          %v1618 = vunpack.c.h.b16 %v1546
          %v1619 = vunpack.c.l.b16 %v1547
          %v1620 = vunpack.c.h.b16 %v1547
          %v1621 = vunpack.c.l.b16 %v1548
          %v1622 = vunpack.c.h.b16 %v1548
          %v1623 = vunpack.c.l.b16 %v1549
          %v1624 = vunpack.c.h.b16 %v1549
          %v1625 = vunpack.c.l.b16 %v1550
          %v1626 = vunpack.c.h.b16 %v1550
          %v1627 = vunpack.c.l.b16 %v1551
          %v1628 = vunpack.c.h.b16 %v1551
          %v1629 = vunpack.c.l.b16 %v1552
          %v1630 = vunpack.c.h.b16 %v1552
          %v1631 = vunpack.c.l.b16 %v1553
          %v1632 = vunpack.c.h.b16 %v1553
          %v1633 = vunpack.c.l.b16 %v1554
          %v1634 = vunpack.c.h.b16 %v1554
          %v1635 = vunpack.c.l.b16 %v1555
          %v1636 = vunpack.c.h.b16 %v1555
          %v1637 = vunpack.c.l.b16 %v1556
          %v1638 = vunpack.c.h.b16 %v1556
          %v1639 = vunpack.c.l.b16 %v1557
          %v1640 = vunpack.c.h.b16 %v1557
          %v1641 = vunpack.c.l.b16 %v1558
          %v1642 = vunpack.c.h.b16 %v1558
          %v1643 = vunpack.c.l.b16 %v1559
          %v1644 = vunpack.c.h.b16 %v1559
          %v1645 = vunpack.c.l.b16 %v1560
          %v1646 = vunpack.c.h.b16 %v1560
          %v1647 = vunpack.c.l.b16 %v1561
          %v1648 = vunpack.c.h.b16 %v1561
          %v1649 = vunpack.c.l.b16 %v1562
          %v1650 = vunpack.c.h.b16 %v1562
          %v1651 = vunpack.c.l.b16 %v1563
          %v1652 = vunpack.c.h.b16 %v1563
          %v1653 = vunpack.c.l.b16 %v1564
          %v1654 = vunpack.c.h.b16 %v1564
          %v1655 = vunpack.c.l.b16 %v1565
          %v1656 = vunpack.c.h.b16 %v1565
          %v1657 = vunpack.c.l.b16 %v1566
          %v1658 = vunpack.c.h.b16 %v1566
          %v1659 = vunpack.c.l.b16 %v1567
          %v1660 = vunpack.c.h.b16 %v1567
          %v1661 = vunpack.c.l.b16 %v1568
          %v1662 = vunpack.c.h.b16 %v1568
          %v1663 = vunpack.c.l.b16 %v1569
          %v1664 = vunpack.c.h.b16 %v1569
          %v1665 = vunpack.c.l.b16 %v1570
          %v1666 = vunpack.c.h.b16 %v1570
          %v1667 = vpack.c.b16 %v1603, %v1603
          %v1668 = vpack.c.b16 %v1604, %v1604
          %v1669 = vpack.c.b16 %v1605, %v1605
          %v1670 = vpack.c.b16 %v1606, %v1606
          %v1671 = vpack.c.b16 %v1607, %v1607
          %v1672 = vpack.c.b16 %v1608, %v1608
          %v1673 = vpack.c.b16 %v1609, %v1609
          %v1674 = vpack.c.b16 %v1610, %v1610
          %v1675 = vpack.c.b16 %v1611, %v1611
          %v1676 = vpack.c.b16 %v1612, %v1612
          %v1677 = vpack.c.b16 %v1613, %v1613
          %v1678 = vpack.c.b16 %v1614, %v1614
          %v1679 = vpack.c.b16 %v1615, %v1615
          %v1680 = vpack.c.b16 %v1616, %v1616
          %v1681 = vpack.c.b16 %v1617, %v1617
          %v1682 = vpack.c.b16 %v1618, %v1618
          %v1683 = vpack.c.b16 %v1619, %v1619
          %v1684 = vpack.c.b16 %v1620, %v1620
          %v1685 = vpack.c.b16 %v1621, %v1621
          %v1686 = vpack.c.b16 %v1622, %v1622
          %v1687 = vpack.c.b16 %v1623, %v1623
          %v1688 = vpack.c.b16 %v1624, %v1624
          %v1689 = vpack.c.b16 %v1625, %v1625
          %v1690 = vpack.c.b16 %v1626, %v1626
          %v1691 = vpack.c.b16 %v1627, %v1627
          %v1692 = vpack.c.b16 %v1628, %v1628
          %v1693 = vpack.c.b16 %v1629, %v1629
          %v1694 = vpack.c.b16 %v1630, %v1630
          %v1695 = vpack.c.b16 %v1631, %v1631
          %v1696 = vpack.c.b16 %v1632, %v1632
          %v1697 = vpack.c.b16 %v1633, %v1633
          %v1698 = vpack.c.b16 %v1634, %v1634
          %v1699 = vpack.c.b16 %v1635, %v1635
          %v1700 = vpack.c.b16 %v1636, %v1636
          %v1701 = vpack.c.b16 %v1637, %v1637
          %v1702 = vpack.c.b16 %v1638, %v1638
          %v1703 = vpack.c.b16 %v1639, %v1639
          %v1704 = vpack.c.b16 %v1640, %v1640
          %v1705 = vpack.c.b16 %v1641, %v1641
          %v1706 = vpack.c.b16 %v1642, %v1642
          %v1707 = vpack.c.b16 %v1643, %v1643
          %v1708 = vpack.c.b16 %v1644, %v1644
          %v1709 = vpack.c.b16 %v1645, %v1645
          %v1710 = vpack.c.b16 %v1646, %v1646
          %v1711 = vpack.c.b16 %v1647, %v1647
          %v1712 = vpack.c.b16 %v1648, %v1648
          %v1713 = vpack.c.b16 %v1649, %v1649
          %v1714 = vpack.c.b16 %v1650, %v1650
          %v1715 = vpack.c.b16 %v1651, %v1651
          %v1716 = vpack.c.b16 %v1652, %v1652
          %v1717 = vpack.c.b16 %v1653, %v1653
          %v1718 = vpack.c.b16 %v1654, %v1654
          %v1719 = vpack.c.b16 %v1655, %v1655
          %v1720 = vpack.c.b16 %v1656, %v1656
          %v1721 = vpack.c.b16 %v1657, %v1657
          %v1722 = vpack.c.b16 %v1658, %v1658
          %v1723 = vpack.c.b16 %v1659, %v1659
          %v1724 = vpack.c.b16 %v1660, %v1660
          %v1725 = vpack.c.b16 %v1661, %v1661
          %v1726 = vpack.c.b16 %v1662, %v1662
          %v1727 = vpack.c.b16 %v1663, %v1663
          %v1728 = vpack.c.b16 %v1664, %v1664
          %v1729 = vpack.c.b16 %v1665, %v1665
          %v1730 = vpack.c.b16 %v1666, %v1666
          %vm1795 = vcmask 519168
          %1796 = vst.msk [vmem:[%s271] sm:$0xf] %vm1795, %v1667
          %1797 = vst.msk [vmem:[%s271 + $0x4] sm:$0xf] %vm1795, %v1668
          %1798 = vst.msk [vmem:[%s271 + $0x8] sm:$0xf] %vm1795, %v1669
          %1799 = vst.msk [vmem:[%s271 + $0xc] sm:$0xf] %vm1795, %v1670
          %1800 = vst.msk [vmem:[%s271 + $0x10] sm:$0xf] %vm1795, %v1671
          %1801 = vst.msk [vmem:[%s271 + $0x14] sm:$0xf] %vm1795, %v1672
          %1802 = vst.msk [vmem:[%s271 + $0x18] sm:$0xf] %vm1795, %v1673
          %1803 = vst.msk [vmem:[%s271 + $0x1c] sm:$0xf] %vm1795, %v1674
          %1804 = vst.msk [vmem:[%s271 + $0x20] sm:$0xf] %vm1795, %v1675
          %1805 = vst.msk [vmem:[%s271 + $0x24] sm:$0xf] %vm1795, %v1676
          %1806 = vst.msk [vmem:[%s271 + $0x28] sm:$0xf] %vm1795, %v1677
          %1807 = vst.msk [vmem:[%s271 + $0x2c] sm:$0xf] %vm1795, %v1678
          %1808 = vst.msk [vmem:[%s271 + $0x30] sm:$0xf] %vm1795, %v1679
          %1809 = vst.msk [vmem:[%s271 + $0x34] sm:$0xf] %vm1795, %v1680
          %1810 = vst.msk [vmem:[%s271 + $0x38] sm:$0xf] %vm1795, %v1681
          %1811 = vst.msk [vmem:[%s271 + $0x3c] sm:$0xf] %vm1795, %v1682
          %1812 = vst.msk [vmem:[%s271 + $0x40] sm:$0xf] %vm1795, %v1683
          %1813 = vst.msk [vmem:[%s271 + $0x44] sm:$0xf] %vm1795, %v1684
          %1814 = vst.msk [vmem:[%s271 + $0x48] sm:$0xf] %vm1795, %v1685
          %1815 = vst.msk [vmem:[%s271 + $0x4c] sm:$0xf] %vm1795, %v1686
          %1816 = vst.msk [vmem:[%s271 + $0x50] sm:$0xf] %vm1795, %v1687
          %1817 = vst.msk [vmem:[%s271 + $0x54] sm:$0xf] %vm1795, %v1688
          %1818 = vst.msk [vmem:[%s271 + $0x58] sm:$0xf] %vm1795, %v1689
          %1819 = vst.msk [vmem:[%s271 + $0x5c] sm:$0xf] %vm1795, %v1690
          %1820 = vst.msk [vmem:[%s271 + $0x60] sm:$0xf] %vm1795, %v1691
          %1821 = vst.msk [vmem:[%s271 + $0x64] sm:$0xf] %vm1795, %v1692
          %1822 = vst.msk [vmem:[%s271 + $0x68] sm:$0xf] %vm1795, %v1693
          %1823 = vst.msk [vmem:[%s271 + $0x6c] sm:$0xf] %vm1795, %v1694
          %1824 = vst.msk [vmem:[%s271 + $0x70] sm:$0xf] %vm1795, %v1695
          %1825 = vst.msk [vmem:[%s271 + $0x74] sm:$0xf] %vm1795, %v1696
          %1826 = vst.msk [vmem:[%s271 + $0x78] sm:$0xf] %vm1795, %v1697
          %1827 = vst.msk [vmem:[%s271 + $0x7c] sm:$0xf] %vm1795, %v1698
          %1828 = vst.msk [vmem:[%s271 + $0x80] sm:$0xf] %vm1795, %v1699
          %1829 = vst.msk [vmem:[%s271 + $0x84] sm:$0xf] %vm1795, %v1700
          %1830 = vst.msk [vmem:[%s271 + $0x88] sm:$0xf] %vm1795, %v1701
          %1831 = vst.msk [vmem:[%s271 + $0x8c] sm:$0xf] %vm1795, %v1702
          %1832 = vst.msk [vmem:[%s271 + $0x90] sm:$0xf] %vm1795, %v1703
          %1833 = vst.msk [vmem:[%s271 + $0x94] sm:$0xf] %vm1795, %v1704
          %1834 = vst.msk [vmem:[%s271 + $0x98] sm:$0xf] %vm1795, %v1705
          %1835 = vst.msk [vmem:[%s271 + $0x9c] sm:$0xf] %vm1795, %v1706
          %1836 = vst.msk [vmem:[%s271 + $0xa0] sm:$0xf] %vm1795, %v1707
          %1837 = vst.msk [vmem:[%s271 + $0xa4] sm:$0xf] %vm1795, %v1708
          %1838 = vst.msk [vmem:[%s271 + $0xa8] sm:$0xf] %vm1795, %v1709
          %1839 = vst.msk [vmem:[%s271 + $0xac] sm:$0xf] %vm1795, %v1710
          %1840 = vst.msk [vmem:[%s271 + $0xb0] sm:$0xf] %vm1795, %v1711
          %1841 = vst.msk [vmem:[%s271 + $0xb4] sm:$0xf] %vm1795, %v1712
          %1842 = vst.msk [vmem:[%s271 + $0xb8] sm:$0xf] %vm1795, %v1713
          %1843 = vst.msk [vmem:[%s271 + $0xbc] sm:$0xf] %vm1795, %v1714
          %1844 = vst.msk [vmem:[%s271 + $0xc0] sm:$0xf] %vm1795, %v1715
          %1845 = vst.msk [vmem:[%s271 + $0xc4] sm:$0xf] %vm1795, %v1716
          %1846 = vst.msk [vmem:[%s271 + $0xc8] sm:$0xf] %vm1795, %v1717
          %1847 = vst.msk [vmem:[%s271 + $0xcc] sm:$0xf] %vm1795, %v1718
          %1848 = vst.msk [vmem:[%s271 + $0xd0] sm:$0xf] %vm1795, %v1719
          %1849 = vst.msk [vmem:[%s271 + $0xd4] sm:$0xf] %vm1795, %v1720
          %1850 = vst.msk [vmem:[%s271 + $0xd8] sm:$0xf] %vm1795, %v1721
          %1851 = vst.msk [vmem:[%s271 + $0xdc] sm:$0xf] %vm1795, %v1722
          %1852 = vst.msk [vmem:[%s271 + $0xe0] sm:$0xf] %vm1795, %v1723
          %1853 = vst.msk [vmem:[%s271 + $0xe4] sm:$0xf] %vm1795, %v1724
          %1854 = vst.msk [vmem:[%s271 + $0xe8] sm:$0xf] %vm1795, %v1725
          %1855 = vst.msk [vmem:[%s271 + $0xec] sm:$0xf] %vm1795, %v1726
          %1856 = vst.msk [vmem:[%s271 + $0xf0] sm:$0xf] %vm1795, %v1727
          %1857 = vst.msk [vmem:[%s271 + $0xf4] sm:$0xf] %vm1795, %v1728
          %1858 = vst.msk [vmem:[%s271 + $0xf8] sm:$0xf] %vm1795, %v1729
          %1859 = vst.msk [vmem:[%s271 + $0xfc] sm:$0xf] %vm1795, %v1730
        $region44: #{tpu_custom_call.1} parent=31 // pred_fallthru
          _
        %s1860 = smul.u32 64, %s22
        %p1861 = scmp.lt.s32.totalorder %s1860, 255
        %s1862 = scalar_select %p1861, %s1860, 255
        %p1863 = scmp.lt.s32.totalorder %s23, 0
        %s1864 = scalar_select %p1863, %s23, 0
        %s1865 = sadd.s32 %s1864, %s1862
        %s1866 = smul.addr %s1865, 4
        %s1867 = scalar_lea.vmem %s3, %s1866
        // Predicated region
        $region45: #{tpu_custom_call.1} parent=31 // pred_check
          %p1868 = pneg %p138
        $region46: #{tpu_custom_call.1} parent=31 // pred_check_branch
          %1870 = sbr.rel (%p1868) target = $region48
        $region47: #{tpu_custom_call.1} parent=31 // pred_region
          %s1871 = smul.u32 64, %s22
        $region48: #{tpu_custom_call.1} parent=31 // pred_fallthru
          _
      $region32: #{tpu_custom_call.1} parent=5 // pred_fallthru
        _
      %p1872 = scmp.le.s32.totalorder 2, %s12
      // Predicated region
      $region49: #{tpu_custom_call.1} parent=5 // pred_check
        %p1873 = pneg %p1872
      $region50: #{tpu_custom_call.1} parent=5 // pred_check_branch
        %1875 = sbr.rel (%p1873) target = $region52
      $region51: #{tpu_custom_call.1} parent=5 // pred_region
        %s1876 = ssub.s32 %s12, 2
        // Predicated region
        $region53: #{tpu_custom_call.1} parent=51 // pred_check
          %p1877 = pneg %p144
        $region54: #{tpu_custom_call.1} parent=51 // pred_check_branch
          %1879 = sbr.rel (%p1877) target = $region56
        $region55: #{tpu_custom_call.1} parent=51 // pred_region
          %s1880 = smul.u32 64, %s25
          %p1881 = scmp.lt.s32.totalorder %s1880, 255
          %s1882 = scalar_select %p1881, %s1880, 255
          %p1883 = scmp.lt.s32.totalorder %s26, 0
          %s1884 = scalar_select %p1883, %s26, 0
          %s1885 = sadd.s32 %s1884, %s1882
          %s1886 = smul.addr %s1885, 4
          %s1887 = scalar_lea.vmem %s3, %s1886
        $region56: #{tpu_custom_call.1} parent=51 // pred_fallthru
          _
      $region52: #{tpu_custom_call.1} parent=5 // pred_fallthru
        _
    $region6: #{tpu_custom_call.1} parent=1 // loop_footer
      %s16 = sadd.s32 1, %s12
    $region7: #{tpu_custom_call.1} parent=1 // loop_footer_branch
      %11 = sbr.rel target = $region3
    $region8: #{tpu_custom_call.1} parent=1 // loop_exit
      _
    %1888 = vsyncpa [#allocation4], 1
    %s1889 = scalar_lea.sflag [#allocation4], 1
    %1890 = vsyncpa %s1889, 1

</llo_original>
